<compile_context>
chip_gen: v7x
topology: tpu7x:2x2x1
jax: 0.10.0
libtpu: 0.0.40
codegen_flags: <defaults>
</compile_context>

<pallas_src>
import math

import jax
import jax.numpy as jnp
from jax.experimental import pallas as pl
from jax.experimental.pallas import tpu as pltpu

# bf16 operands on the MXU everywhere (f32 accumulation via preferred_element_type).
# Set to jnp.float32 for tighter numerical parity with the PyTorch f32 reference.
COMPUTE_DTYPE = jnp.bfloat16


def _round_up(x, m):
    return (x + m - 1) // m * m


def _cdiv(a, b):
    return -(-a // b)


def _pick_tile(m, tile_max, min_steps=2):
    """Pick a lane tile (multiple of 128) and the padded lane extent.

    Keeps >=`min_steps` grid steps when there is enough work: v7x has 2 TensorCores
    and dimension_semantics=("parallel",) shards grid steps across them, so a
    single-step grid would idle one core there (harmless on v5e/v6e).
    """
    m128 = _round_up(max(m, 1), 128)
    tm = min(tile_max, m128)
    if m128 > 128 and _cdiv(m128, tm) < min_steps:
        tm = _round_up(_cdiv(m128, min_steps), 128)
    return tm, _round_up(m, tm)


# ------------------------------ Pallas kernels ------------------------------

def _conv_pool_relu_kernel(p_ref, w_ref, b_ref, o_ref):
    """Fused conv(-as-matmul) + bias + 2x2 max-pool + ReLU.

    p_ref: (4, K, TM)  the four 2x2-pool-window slabs of transposed im2col patches
    w_ref: (OC, K)     conv weight reshaped to a matrix (bf16)
    b_ref: (OC, 1)     bias column (f32)
    o_ref: (OC, TM)    pooled+ReLU activation; channels on sublanes, pooled
                       spatial*batch on lanes (lane-dense store).
    Bias commutes with max, so it is added after the window max.
    """
    w = w_ref[...]
    acc = jnp.dot(w, p_ref[0], preferred_element_type=jnp.float32)
    for i in range(1, 4):
        acc = jnp.maximum(
            acc, jnp.dot(w, p_ref[i], preferred_element_type=jnp.float32))
    o_ref[...] = jnp.maximum(acc + b_ref[...], 0.0).astype(o_ref.dtype)


def _fc_fused_kernel(x_ref, w1_ref, b1_ref, w2_ref, b2_ref, o_ref, h_ref):
    """Fused fc1 + ReLU + fc2.

    The hidden activation is staged through a bf16 VMEM scratch (h_ref) so larger
    lane tiles do not spill the vreg file; both matmuls are bf16 x bf16 with f32
    accumulation.
    """
    h = jnp.dot(w1_ref[...], x_ref[...], preferred_element_type=jnp.float32)
    h_ref[...] = jnp.maximum(h + b1_ref[...], 0.0).astype(h_ref.dtype)
    o = jnp.dot(w2_ref[...], h_ref[...], preferred_element_type=jnp.float32)
    o_ref[...] = (o + b2_ref[...]).astype(o_ref.dtype)


# ------------------------------ layer wrappers ------------------------------

def conv_pool_relu(a_chwn, w_oihw, b, *, tm_max):
    """relu(max_pool2d(conv2d(x), 2)) in one Pallas kernel.

    a_chwn: activation in (C, H, W, N) layout.
    Returns the pooled activation in (OC, PH, PW, N) layout (COMPUTE_DTYPE).
    """
    oc, ic, kh, kw = w_oihw.shape
    c, h, w, n = a_chwn.shape
    assert c == ic
    oh, ow = h - kh + 1, w - kw + 1
    assert oh % 2 == 0 and ow % 2 == 0
    ph, pw = oh // 2, ow // 2
    k_dim = ic * kh * kw
    mp = ph * pw * n                       # pooled spatial*batch (lane axis)
    tm, mp_pad = _pick_tile(mp, tm_max)

    # Cast BEFORE im2col so the materialized patch tensor only ever exists in bf16.
    a = a_chwn.astype(COMPUTE_DTYPE)

    # Pool-window-major transposed im2col, lane axis m = (ph, pw, n):
    #   patches[wnd=(dy,dx), k=(ic,ki,kj), m=(ph,pw,n)] = a[ic, 2ph+dy+ki, 2pw+dx+kj, n]
    slabs = []
    for dy in range(2):
        for dx in range(2):
            cols = []
            for ki in range(kh):
                for kj in range(kw):
                    cols.append(a[:,
                                  dy + ki: dy + ki + 2 * ph - 1: 2,
                                  dx + kj: dx + kj + 2 * pw - 1: 2,
                                  :])
            t = jnp.stack(cols, axis=1)            # (C, KH*KW, PH, PW, N)
            slabs.append(t.reshape(k_dim, mp))
    patches = jnp.stack(slabs, axis=0)             # (4, K, Mp)  (bf16)
    if mp_pad != mp:
        patches = jnp.pad(patches, ((0, 0), (0, 0), (0, mp_pad - mp)))

    w_mat = w_oihw.reshape(oc, k_dim).astype(COMPUTE_DTYPE)   # (OC, K)
    b_col = b.reshape(oc, 1).astype(jnp.float32)

    out = pl.pallas_call(
        _conv_pool_relu_kernel,
        out_shape=jax.ShapeDtypeStruct((oc, mp_pad), COMPUTE_DTYPE),
        grid=(mp_pad // tm,),
        in_specs=[
            pl.BlockSpec((4, k_dim, tm), lambda i: (0, 0, i)),
            pl.BlockSpec((oc, k_dim), lambda i: (0, 0)),
            pl.BlockSpec((oc, 1), lambda i: (0, 0)),
        ],
        out_specs=pl.BlockSpec((oc, tm), lambda i: (0, i)),
        compiler_params=pltpu.CompilerParams(
            dimension_semantics=("parallel",),
            vmem_limit_bytes=32 * 1024 * 1024),
    )(patches, w_mat, b_col)

    return out[:, :mp].reshape(oc, ph, pw, n)


def fc1_relu_fc2(flat_t, w1, b1, w2, b2, *, tn_max=2048):
    """fc2(relu(fc1(x))) fused; flat_t is (in_features, N), returns (out, N) f32."""
    kin, n = flat_t.shape
    hdim = w1.shape[0]
    ncls = w2.shape[0]
    tn, n_pad = _pick_tile(n, tn_max)

    x = flat_t.astype(COMPUTE_DTYPE)
    if n_pad != n:
        x = jnp.pad(x, ((0, 0), (0, n_pad - n)))

    out = pl.pallas_call(
        _fc_fused_kernel,
        out_shape=jax.ShapeDtypeStruct((ncls, n_pad), jnp.float32),
        grid=(n_pad // tn,),
        in_specs=[
            pl.BlockSpec((kin, tn), lambda i: (0, i)),
            pl.BlockSpec((hdim, kin), lambda i: (0, 0)),
            pl.BlockSpec((hdim, 1), lambda i: (0, 0)),
            pl.BlockSpec((ncls, hdim), lambda i: (0, 0)),
            pl.BlockSpec((ncls, 1), lambda i: (0, 0)),
        ],
        out_specs=pl.BlockSpec((ncls, tn), lambda i: (0, i)),
        scratch_shapes=[pltpu.VMEM((hdim, tn), COMPUTE_DTYPE)],
        compiler_params=pltpu.CompilerParams(
            dimension_semantics=("parallel",),
            vmem_limit_bytes=32 * 1024 * 1024),
    )(x,
      w1.astype(COMPUTE_DTYPE), b1.reshape(hdim, 1).astype(jnp.float32),
      w2.astype(COMPUTE_DTYPE), b2.reshape(ncls, 1).astype(jnp.float32))

    return out[:, :n]


# ------------------------------ model definition ----------------------------

def init_params(key, intermediate_hidden=50):
    """Deterministic PyTorch-like (uniform +-1/sqrt(fan_in)) init."""
    def uniform(k, shape, fan_in):
        bound = 1.0 / math.sqrt(fan_in)
        return jax.random.uniform(k, shape, jnp.float32, -bound, bound)

    ks = jax.random.split(key, 8)
    return {
        "conv1_w": uniform(ks[0], (10, 1, 5, 5), 1 * 5 * 5),
        "conv1_b": uniform(ks[1], (10,), 1 * 5 * 5),
        "conv2_w": uniform(ks[2], (20, 10, 5, 5), 10 * 5 * 5),
        "conv2_b": uniform(ks[3], (20,), 10 * 5 * 5),
        "fc1_w": uniform(ks[4], (intermediate_hidden, 320), 320),
        "fc1_b": uniform(ks[5], (intermediate_hidden,), 320),
        "fc2_w": uniform(ks[6], (10, intermediate_hidden), intermediate_hidden),
        "fc2_b": uniform(ks[7], (10,), intermediate_hidden),
    }


def net_forward(params, x_nchw):
    # External interface is NCHW (PyTorch). Internally use (C, H, W, N): the lane
    # axis carries (pooled spatial, batch) everywhere, so conv2 consumes conv1's
    # output directly and the flatten before fc1 is a pure reshape.
    x = jnp.transpose(x_nchw.astype(COMPUTE_DTYPE), (1, 2, 3, 0))   # (1, 28, 28, N)

    # x = relu(max_pool2d(conv1(x), 2))               -- one fused Pallas kernel
    p1 = conv_pool_relu(x, params["conv1_w"], params["conv1_b"],
                        tm_max=2048)                                # (10, 12, 12, N)

    # x = relu(max_pool2d(conv2_drop(conv2(x)), 2))
    # TODO(synk): Dropout2d / F.dropout are identity in eval mode; training-mode
    # stochastic masking (pltpu.prng_*) not implemented.
    p2 = conv_pool_relu(p1, params["conv2_w"], params["conv2_b"],
                        tm_max=1536)   # OC=20 -> f32 acc <= ~120 KiB  (20, 4, 4, N)

    # x = x.view(-1, 320): PyTorch flattens per sample in (C, H, W) order, which is
    # exactly the (OC, PH, PW) leading axes here -> pure reshape, no transpose.
    n = p2.shape[-1]
    flat_t = p2.reshape(320, n)                                     # (320, N)

    # x = relu(fc1(x)); F.dropout (eval: identity); x = fc2(x)  -- one fused kernel
    out_t = fc1_relu_fc2(flat_t, params["fc1_w"], params["fc1_b"],
                         params["fc2_w"], params["fc2_b"])          # (10, N) f32
    return out_t.T                                                  # (N, 10)


# ------------------------------ pure-JAX reference ---------------------------

def net_reference(params, x_nchw):
    x = x_nchw.astype(jnp.float32)

    def conv(v, w, b):
        y = jax.lax.conv_general_dilated(
            v, w, window_strides=(1, 1), padding="VALID",
            dimension_numbers=("NCHW", "OIHW", "NCHW"))
        return y + b[None, :, None, None]

    def pool_relu(y):
        n, c, h, w = y.shape
        y = y.reshape(n, c, h // 2, 2, w // 2, 2).max(axis=(3, 5))
        return jnp.maximum(y, 0.0)

    p1 = pool_relu(conv(x, params["conv1_w"], params["conv1_b"]))
    p2 = pool_relu(conv(p1, params["conv2_w"], params["conv2_b"]))
    flat = p2.reshape(p2.shape[0], -1)
    h = jnp.maximum(flat @ params["fc1_w"].T + params["fc1_b"], 0.0)
    return h @ params["fc2_w"].T + params["fc2_b"]


if __name__ == "__main__":
    key = jax.random.PRNGKey(0)
    pkey, xkey = jax.random.split(key)
    params = init_params(pkey, intermediate_hidden=50)
    # MNIST geometry is forced by fc1's 320 = 20*4*4 input: spatial must be 28x28.
    x = jax.random.normal(xkey, (2, 1, 28, 28), jnp.float32)

    y = jax.jit(net_forward)(params, x)
    jax.block_until_ready(y)
    assert y.shape == (2, 10) and y.dtype == jnp.float32

    # Loose tolerance: all matmul operands + inter-layer activations are bf16
    # (f32 MXU accumulation). Set COMPUTE_DTYPE = jnp.float32 for tight parity.
    y_ref = net_reference(params, x)
    assert jnp.allclose(y, y_ref, atol=5e-2, rtol=5e-2), \
        float(jnp.max(jnp.abs(y - y_ref)))

    print("KERNEL_OK")
</pallas_src>

<mosaic_0001>
module attributes {stable_mosaic.version = 11 : i64} {
  func.func @_conv_pool_relu_kernel(%arg0: i32, %arg1: memref<4x25x256xbf16, #tpu.memory_space<vmem>>, %arg2: memref<10x25xbf16, #tpu.memory_space<vmem>>, %arg3: memref<10x1xf32, #tpu.memory_space<vmem>>, %arg4: memref<10x256xbf16, #tpu.memory_space<vmem>>) attributes {dimension_semantics = [#tpu.dimension_semantics<parallel>], iteration_bounds = array<i64: 2>, scalar_prefetch = 0 : i64, scratch_operands = 0 : i64, tpu.core_type = #tpu.core_type<tc>, window_params = [{transform_indices = @transform_0, window_bounds = array<i64: 4, 25, 256>}, {pipeline_mode = #tpu.pipeline_mode<synchronous>, transform_indices = @transform_1, window_bounds = array<i64: 10, 25>}, {pipeline_mode = #tpu.pipeline_mode<synchronous>, transform_indices = @transform_2, window_bounds = array<i64: 10, 1>}, {transform_indices = @transform_3, window_bounds = array<i64: 10, 256>}]} {
    %c0 = arith.constant 0 : index
    %c0_0 = arith.constant 0 : index
    %0 = vector.load %arg2[%c0, %c0_0] : memref<10x25xbf16, #tpu.memory_space<vmem>>, vector<10x25xbf16>
    %c0_1 = arith.constant 0 : index
    %c0_2 = arith.constant 0 : index
    %c0_3 = arith.constant 0 : index
    %1 = vector.load %arg1[%c0_1, %c0_2, %c0_3] : memref<4x25x256xbf16, #tpu.memory_space<vmem>>, vector<1x25x256xbf16>
    %2 = vector.shape_cast %1 : vector<1x25x256xbf16> to vector<25x256xbf16>
    %cst = arith.constant dense<0.000000e+00> : vector<10x256xf32>
    %3 = tpu.matmul %0, %2, %cst {dimension_numbers = #tpu.dot_dimension_numbers<[1], [0], [0], [1], [0, 0, 1, 1], [], []>} : vector<10x25xbf16>, vector<25x256xbf16>, vector<10x256xf32> -> vector<10x256xf32>
    %c1 = arith.constant 1 : index
    %c0_4 = arith.constant 0 : index
    %c0_5 = arith.constant 0 : index
    %4 = vector.load %arg1[%c1, %c0_4, %c0_5] : memref<4x25x256xbf16, #tpu.memory_space<vmem>>, vector<1x25x256xbf16>
    %5 = vector.shape_cast %4 : vector<1x25x256xbf16> to vector<25x256xbf16>
    %cst_6 = arith.constant dense<0.000000e+00> : vector<10x256xf32>
    %6 = tpu.matmul %0, %5, %cst_6 {dimension_numbers = #tpu.dot_dimension_numbers<[1], [0], [0], [1], [0, 0, 1, 1], [], []>} : vector<10x25xbf16>, vector<25x256xbf16>, vector<10x256xf32> -> vector<10x256xf32>
    %7 = arith.maximumf %3, %6 : vector<10x256xf32>
    %c2 = arith.constant 2 : index
    %c0_7 = arith.constant 0 : index
    %c0_8 = arith.constant 0 : index
    %8 = vector.load %arg1[%c2, %c0_7, %c0_8] : memref<4x25x256xbf16, #tpu.memory_space<vmem>>, vector<1x25x256xbf16>
    %9 = vector.shape_cast %8 : vector<1x25x256xbf16> to vector<25x256xbf16>
    %cst_9 = arith.constant dense<0.000000e+00> : vector<10x256xf32>
    %10 = tpu.matmul %0, %9, %cst_9 {dimension_numbers = #tpu.dot_dimension_numbers<[1], [0], [0], [1], [0, 0, 1, 1], [], []>} : vector<10x25xbf16>, vector<25x256xbf16>, vector<10x256xf32> -> vector<10x256xf32>
    %11 = arith.maximumf %7, %10 : vector<10x256xf32>
    %c3 = arith.constant 3 : index
    %c0_10 = arith.constant 0 : index
    %c0_11 = arith.constant 0 : index
    %12 = vector.load %arg1[%c3, %c0_10, %c0_11] : memref<4x25x256xbf16, #tpu.memory_space<vmem>>, vector<1x25x256xbf16>
    %13 = vector.shape_cast %12 : vector<1x25x256xbf16> to vector<25x256xbf16>
    %cst_12 = arith.constant dense<0.000000e+00> : vector<10x256xf32>
    %14 = tpu.matmul %0, %13, %cst_12 {dimension_numbers = #tpu.dot_dimension_numbers<[1], [0], [0], [1], [0, 0, 1, 1], [], []>} : vector<10x25xbf16>, vector<25x256xbf16>, vector<10x256xf32> -> vector<10x256xf32>
    %15 = arith.maximumf %11, %14 : vector<10x256xf32>
    %c0_13 = arith.constant 0 : index
    %c0_14 = arith.constant 0 : index
    %16 = vector.load %arg3[%c0_13, %c0_14] : memref<10x1xf32, #tpu.memory_space<vmem>>, vector<10x1xf32>
    %17 = vector.broadcast %16 : vector<10x1xf32> to vector<10x256xf32>
    %18 = arith.addf %15, %17 : vector<10x256xf32>
    %cst_15 = arith.constant 0.000000e+00 : f32
    %19 = vector.broadcast %cst_15 : f32 to vector<10x256xf32>
    %20 = arith.maximumf %18, %19 : vector<10x256xf32>
    %21 = arith.truncf %20 : vector<10x256xf32> to vector<10x256xbf16>
    %c0_16 = arith.constant 0 : index
    %c0_17 = arith.constant 0 : index
    %22 = vector.load %arg4[%c0_16, %c0_17] : memref<10x256xbf16, #tpu.memory_space<vmem>>, vector<10x256xbf16>
    tpu.vector_store %arg4[%c0_16, %c0_17], %21 {strides = array<i32>} : memref<10x256xbf16, #tpu.memory_space<vmem>>, vector<10x256xbf16>,
    return
  }
  func.func @transform_0(%arg0: i32) -> (i32, i32, i32) {
    %c0_i32 = arith.constant 0 : i32
    %c0_i32_0 = arith.constant 0 : i32
    %c0_i32_1 = arith.constant 0 : i32
    return %c0_i32, %c0_i32_0, %arg0 : i32, i32, i32
  }
  func.func @transform_1(%arg0: i32) -> (i32, i32) {
    %c0_i32 = arith.constant 0 : i32
    %c0_i32_0 = arith.constant 0 : i32
    %c0_i32_1 = arith.constant 0 : i32
    return %c0_i32, %c0_i32_0 : i32, i32
  }
  func.func @transform_2(%arg0: i32) -> (i32, i32) {
    %c0_i32 = arith.constant 0 : i32
    %c0_i32_0 = arith.constant 0 : i32
    %c0_i32_1 = arith.constant 0 : i32
    return %c0_i32, %c0_i32_0 : i32, i32
  }
  func.func @transform_3(%arg0: i32) -> (i32, i32) {
    %c0_i32 = arith.constant 0 : i32
    %c0_i32_0 = arith.constant 0 : i32
    return %c0_i32, %arg0 : i32, i32
  }
}

module attributes {stable_mosaic.version = 11 : i64} {
  func.func @_conv_pool_relu_kernel(%arg0: i32, %arg1: memref<4x250x128xbf16, #tpu.memory_space<vmem>>, %arg2: memref<20x250xbf16, #tpu.memory_space<vmem>>, %arg3: memref<20x1xf32, #tpu.memory_space<vmem>>, %arg4: memref<20x128xbf16, #tpu.memory_space<vmem>>) attributes {dimension_semantics = [#tpu.dimension_semantics<parallel>], iteration_bounds = array<i64: 1>, scalar_prefetch = 0 : i64, scratch_operands = 0 : i64, tpu.core_type = #tpu.core_type<tc>, window_params = [{transform_indices = @transform_0, window_bounds = array<i64: 4, 250, 128>}, {pipeline_mode = #tpu.pipeline_mode<synchronous>, transform_indices = @transform_1, window_bounds = array<i64: 20, 250>}, {pipeline_mode = #tpu.pipeline_mode<synchronous>, transform_indices = @transform_2, window_bounds = array<i64: 20, 1>}, {transform_indices = @transform_3, window_bounds = array<i64: 20, 128>}]} {
    %c0 = arith.constant 0 : index
    %c0_0 = arith.constant 0 : index
    %0 = vector.load %arg2[%c0, %c0_0] : memref<20x250xbf16, #tpu.memory_space<vmem>>, vector<20x250xbf16>
    %c0_1 = arith.constant 0 : index
    %c0_2 = arith.constant 0 : index
    %c0_3 = arith.constant 0 : index
    %1 = vector.load %arg1[%c0_1, %c0_2, %c0_3] : memref<4x250x128xbf16, #tpu.memory_space<vmem>>, vector<1x250x128xbf16>
    %2 = vector.shape_cast %1 : vector<1x250x128xbf16> to vector<250x128xbf16>
    %cst = arith.constant dense<0.000000e+00> : vector<20x128xf32>
    %3 = tpu.matmul %0, %2, %cst {dimension_numbers = #tpu.dot_dimension_numbers<[1], [0], [0], [1], [0, 0, 1, 1], [], []>} : vector<20x250xbf16>, vector<250x128xbf16>, vector<20x128xf32> -> vector<20x128xf32>
    %c1 = arith.constant 1 : index
    %c0_4 = arith.constant 0 : index
    %c0_5 = arith.constant 0 : index
    %4 = vector.load %arg1[%c1, %c0_4, %c0_5] : memref<4x250x128xbf16, #tpu.memory_space<vmem>>, vector<1x250x128xbf16>
    %5 = vector.shape_cast %4 : vector<1x250x128xbf16> to vector<250x128xbf16>
    %cst_6 = arith.constant dense<0.000000e+00> : vector<20x128xf32>
    %6 = tpu.matmul %0, %5, %cst_6 {dimension_numbers = #tpu.dot_dimension_numbers<[1], [0], [0], [1], [0, 0, 1, 1], [], []>} : vector<20x250xbf16>, vector<250x128xbf16>, vector<20x128xf32> -> vector<20x128xf32>
    %7 = arith.maximumf %3, %6 : vector<20x128xf32>
    %c2 = arith.constant 2 : index
    %c0_7 = arith.constant 0 : index
    %c0_8 = arith.constant 0 : index
    %8 = vector.load %arg1[%c2, %c0_7, %c0_8] : memref<4x250x128xbf16, #tpu.memory_space<vmem>>, vector<1x250x128xbf16>
    %9 = vector.shape_cast %8 : vector<1x250x128xbf16> to vector<250x128xbf16>
    %cst_9 = arith.constant dense<0.000000e+00> : vector<20x128xf32>
    %10 = tpu.matmul %0, %9, %cst_9 {dimension_numbers = #tpu.dot_dimension_numbers<[1], [0], [0], [1], [0, 0, 1, 1], [], []>} : vector<20x250xbf16>, vector<250x128xbf16>, vector<20x128xf32> -> vector<20x128xf32>
    %11 = arith.maximumf %7, %10 : vector<20x128xf32>
    %c3 = arith.constant 3 : index
    %c0_10 = arith.constant 0 : index
    %c0_11 = arith.constant 0 : index
    %12 = vector.load %arg1[%c3, %c0_10, %c0_11] : memref<4x250x128xbf16, #tpu.memory_space<vmem>>, vector<1x250x128xbf16>
    %13 = vector.shape_cast %12 : vector<1x250x128xbf16> to vector<250x128xbf16>
    %cst_12 = arith.constant dense<0.000000e+00> : vector<20x128xf32>
    %14 = tpu.matmul %0, %13, %cst_12 {dimension_numbers = #tpu.dot_dimension_numbers<[1], [0], [0], [1], [0, 0, 1, 1], [], []>} : vector<20x250xbf16>, vector<250x128xbf16>, vector<20x128xf32> -> vector<20x128xf32>
    %15 = arith.maximumf %11, %14 : vector<20x128xf32>
    %c0_13 = arith.constant 0 : index
    %c0_14 = arith.constant 0 : index
    %16 = vector.load %arg3[%c0_13, %c0_14] : memref<20x1xf32, #tpu.memory_space<vmem>>, vector<20x1xf32>
    %17 = vector.broadcast %16 : vector<20x1xf32> to vector<20x128xf32>
    %18 = arith.addf %15, %17 : vector<20x128xf32>
    %cst_15 = arith.constant 0.000000e+00 : f32
    %19 = vector.broadcast %cst_15 : f32 to vector<20x128xf32>
    %20 = arith.maximumf %18, %19 : vector<20x128xf32>
    %21 = arith.truncf %20 : vector<20x128xf32> to vector<20x128xbf16>
    %c0_16 = arith.constant 0 : index
    %c0_17 = arith.constant 0 : index
    %22 = vector.load %arg4[%c0_16, %c0_17] : memref<20x128xbf16, #tpu.memory_space<vmem>>, vector<20x128xbf16>
    tpu.vector_store %arg4[%c0_16, %c0_17], %21 {strides = array<i32>} : memref<20x128xbf16, #tpu.memory_space<vmem>>, vector<20x128xbf16>,
    return
  }
  func.func @transform_0(%arg0: i32) -> (i32, i32, i32) {
    %c0_i32 = arith.constant 0 : i32
    %c0_i32_0 = arith.constant 0 : i32
    %c0_i32_1 = arith.constant 0 : i32
    return %c0_i32, %c0_i32_0, %arg0 : i32, i32, i32
  }
  func.func @transform_1(%arg0: i32) -> (i32, i32) {
    %c0_i32 = arith.constant 0 : i32
    %c0_i32_0 = arith.constant 0 : i32
    %c0_i32_1 = arith.constant 0 : i32
    return %c0_i32, %c0_i32_0 : i32, i32
  }
  func.func @transform_2(%arg0: i32) -> (i32, i32) {
    %c0_i32 = arith.constant 0 : i32
    %c0_i32_0 = arith.constant 0 : i32
    %c0_i32_1 = arith.constant 0 : i32
    return %c0_i32, %c0_i32_0 : i32, i32
  }
  func.func @transform_3(%arg0: i32) -> (i32, i32) {
    %c0_i32 = arith.constant 0 : i32
    %c0_i32_0 = arith.constant 0 : i32
    return %c0_i32, %arg0 : i32, i32
  }
}

module attributes {stable_mosaic.version = 11 : i64} {
  func.func @_fc_fused_kernel(%arg0: i32, %arg1: memref<320x128xbf16, #tpu.memory_space<vmem>>, %arg2: memref<50x320xbf16, #tpu.memory_space<vmem>>, %arg3: memref<50x1xf32, #tpu.memory_space<vmem>>, %arg4: memref<10x50xbf16, #tpu.memory_space<vmem>>, %arg5: memref<10x1xf32, #tpu.memory_space<vmem>>, %arg6: memref<10x128xf32, #tpu.memory_space<vmem>>, %arg7: memref<50x128xbf16, #tpu.memory_space<vmem>>) attributes {dimension_semantics = [#tpu.dimension_semantics<parallel>], iteration_bounds = array<i64: 1>, scalar_prefetch = 0 : i64, scratch_operands = 1 : i64, tpu.core_type = #tpu.core_type<tc>, window_params = [{transform_indices = @transform_0, window_bounds = array<i64: 320, 128>}, {pipeline_mode = #tpu.pipeline_mode<synchronous>, transform_indices = @transform_1, window_bounds = array<i64: 50, 320>}, {pipeline_mode = #tpu.pipeline_mode<synchronous>, transform_indices = @transform_2, window_bounds = array<i64: 50, 1>}, {pipeline_mode = #tpu.pipeline_mode<synchronous>, transform_indices = @transform_3, window_bounds = array<i64: 10, 50>}, {pipeline_mode = #tpu.pipeline_mode<synchronous>, transform_indices = @transform_4, window_bounds = array<i64: 10, 1>}, {transform_indices = @transform_5, window_bounds = array<i64: 10, 128>}]} {
    %c0 = arith.constant 0 : index
    %c0_0 = arith.constant 0 : index
    %0 = vector.load %arg2[%c0, %c0_0] : memref<50x320xbf16, #tpu.memory_space<vmem>>, vector<50x320xbf16>
    %c0_1 = arith.constant 0 : index
    %c0_2 = arith.constant 0 : index
    %1 = vector.load %arg1[%c0_1, %c0_2] : memref<320x128xbf16, #tpu.memory_space<vmem>>, vector<320x128xbf16>
    %cst = arith.constant dense<0.000000e+00> : vector<50x128xf32>
    %2 = tpu.matmul %0, %1, %cst {dimension_numbers = #tpu.dot_dimension_numbers<[1], [0], [0], [1], [0, 0, 1, 1], [], []>} : vector<50x320xbf16>, vector<320x128xbf16>, vector<50x128xf32> -> vector<50x128xf32>
    %c0_3 = arith.constant 0 : index
    %c0_4 = arith.constant 0 : index
    %3 = vector.load %arg3[%c0_3, %c0_4] : memref<50x1xf32, #tpu.memory_space<vmem>>, vector<50x1xf32>
    %4 = vector.broadcast %3 : vector<50x1xf32> to vector<50x128xf32>
    %5 = arith.addf %2, %4 : vector<50x128xf32>
    %cst_5 = arith.constant 0.000000e+00 : f32
    %6 = vector.broadcast %cst_5 : f32 to vector<50x128xf32>
    %7 = arith.maximumf %5, %6 : vector<50x128xf32>
    %8 = arith.truncf %7 : vector<50x128xf32> to vector<50x128xbf16>
    %c0_6 = arith.constant 0 : index
    %c0_7 = arith.constant 0 : index
    %9 = vector.load %arg7[%c0_6, %c0_7] : memref<50x128xbf16, #tpu.memory_space<vmem>>, vector<50x128xbf16>
    tpu.vector_store %arg7[%c0_6, %c0_7], %8 {strides = array<i32>} : memref<50x128xbf16, #tpu.memory_space<vmem>>, vector<50x128xbf16>,
    %c0_8 = arith.constant 0 : index
    %c0_9 = arith.constant 0 : index
    %10 = vector.load %arg4[%c0_8, %c0_9] : memref<10x50xbf16, #tpu.memory_space<vmem>>, vector<10x50xbf16>
    %c0_10 = arith.constant 0 : index
    %c0_11 = arith.constant 0 : index
    %11 = vector.load %arg7[%c0_10, %c0_11] : memref<50x128xbf16, #tpu.memory_space<vmem>>, vector<50x128xbf16>
    %cst_12 = arith.constant dense<0.000000e+00> : vector<10x128xf32>
    %12 = tpu.matmul %10, %11, %cst_12 {dimension_numbers = #tpu.dot_dimension_numbers<[1], [0], [0], [1], [0, 0, 1, 1], [], []>} : vector<10x50xbf16>, vector<50x128xbf16>, vector<10x128xf32> -> vector<10x128xf32>
    %c0_13 = arith.constant 0 : index
    %c0_14 = arith.constant 0 : index
    %13 = vector.load %arg5[%c0_13, %c0_14] : memref<10x1xf32, #tpu.memory_space<vmem>>, vector<10x1xf32>
    %14 = vector.broadcast %13 : vector<10x1xf32> to vector<10x128xf32>
    %15 = arith.addf %12, %14 : vector<10x128xf32>
    %c0_15 = arith.constant 0 : index
    %c0_16 = arith.constant 0 : index
    %16 = vector.load %arg6[%c0_15, %c0_16] : memref<10x128xf32, #tpu.memory_space<vmem>>, vector<10x128xf32>
    tpu.vector_store %arg6[%c0_15, %c0_16], %15 {strides = array<i32>} : memref<10x128xf32, #tpu.memory_space<vmem>>, vector<10x128xf32>,
    return
  }
  func.func @transform_0(%arg0: i32) -> (i32, i32) {
    %c0_i32 = arith.constant 0 : i32
    %c0_i32_0 = arith.constant 0 : i32
    return %c0_i32, %arg0 : i32, i32
  }
  func.func @transform_1(%arg0: i32) -> (i32, i32) {
    %c0_i32 = arith.constant 0 : i32
    %c0_i32_0 = arith.constant 0 : i32
    %c0_i32_1 = arith.constant 0 : i32
    return %c0_i32, %c0_i32_0 : i32, i32
  }
  func.func @transform_2(%arg0: i32) -> (i32, i32) {
    %c0_i32 = arith.constant 0 : i32
    %c0_i32_0 = arith.constant 0 : i32
    %c0_i32_1 = arith.constant 0 : i32
    return %c0_i32, %c0_i32_0 : i32, i32
  }
  func.func @transform_3(%arg0: i32) -> (i32, i32) {
    %c0_i32 = arith.constant 0 : i32
    %c0_i32_0 = arith.constant 0 : i32
    %c0_i32_1 = arith.constant 0 : i32
    return %c0_i32, %c0_i32_0 : i32, i32
  }
  func.func @transform_4(%arg0: i32) -> (i32, i32) {
    %c0_i32 = arith.constant 0 : i32
    %c0_i32_0 = arith.constant 0 : i32
    %c0_i32_1 = arith.constant 0 : i32
    return %c0_i32, %c0_i32_0 : i32, i32
  }
  func.func @transform_5(%arg0: i32) -> (i32, i32) {
    %c0_i32 = arith.constant 0 : i32
    %c0_i32_0 = arith.constant 0 : i32
    return %c0_i32, %arg0 : i32, i32
  }
}

</mosaic_0001>

<llo_original>
// kernel: net_forward.3
$region0: #{net_forward.3}
  #allocation0 [shape = 'u32[]', space=smem, size = 0x4, offset = 0x4, fixed_abs, tag = 'smem constant byte address 0x4 - core index']
  #allocation1 [shape = 'u32[144,128]{1,0:T(1,128)}', space=vmem, size = 0x12000, scoped, tag = 'internal scratch']
  %s0 = inlined_call_operand.vmem [shape: bf16[4,25,512], index: 0, kind: input, shape index: {}]
  %s1 = inlined_call_operand.vmem [shape: bf16[10,25], index: 1, kind: input, shape index: {}]
  %s2 = inlined_call_operand.vmem [shape: f32[10,1], index: 2, kind: input, shape index: {}]
  %s3 = inlined_call_operand.vmem [shape: bf16[10,512], index: 3, kind: output, shape index: {}]
  %s4 = sld [smem:[#allocation0]]
  $region117: #{net_forward.3} parent=0
    _
  %s6 = ssub.s32 1, %s4
  %s7 = scalar_select 0, %s6, %s4
  $region1: #{net_forward.3} parent=0
    #allocation2 [shape = 'u8[131072]{0}', space=vmem, size = 0x20000, scoped, tag = 'input window, operand 0']
    #allocation3 [shape = 'u8[16384]{0}', space=vmem, size = 0x4000, scoped, tag = 'output window, operand 0']
    loop: start=0, step=1, limit=4
    $region2: #{net_forward.3} parent=1 // loop_pre_header
      _
    $region3: #{net_forward.3} parent=1 // loop_header
      %s9 = sphi 0, %s13
      %p10 = scmp.ge.s32.totalorder %s9, 4
      %s19 = sphi 0, %s21
      %s22 = sphi 0, %s19
      %s23 = sphi 0, %s22
      %s39 = sphi 0, %s23
      %s43 = sphi 0, %s43
      %s45 = sphi 0, %s43
      %s46 = sphi 0, %s45
      %s60 = sphi 0, %s46
      %s64 = sphi 0, %s64
      %s66 = sphi 0, %s64
      %s67 = sphi 0, %s66
      %s81 = sphi 0, %s67
      %s87 = sphi 0, %s89
      %s90 = sphi 0, %s87
      %s91 = sphi 0, %s90
      %s107 = sphi 0, %s91
    $region4: #{net_forward.3} parent=1 // loop_header_branch
      %12 = sbr.rel (%p10) target = $region8
    $region5: #{net_forward.3} parent=1 // loop_body
      %s14 = ssub.s32 %s9, 1
      %s15 = ssub.s32 %s9, 2
      %s16 = sadd.s32 %s9, 1
      %s17 = ssub.s32 %s9, %s16
      %p18 = scmp.eq.s32.totalorder %s17, 0
      %s20 = sadd.s32 %s19, 1
      %s21 = scalar_select %p18, %s19, %s20
      %p24 = pneg %p18
      %p25 = scmp.eq.s32.totalorder %s9, 1
      %p26 = por %p24, %p25
      %p27 = scmp.ne.s32.totalorder %s19, %s22
      %p28 = scmp.eq.s32.totalorder %s9, 0
      %p29 = por %p27, %p28
      %p30 = scmp.ne.s32.totalorder %s19, %s22
      %p31 = scmp.eq.s32.totalorder %s14, 1
      %p32 = por %p30, %p31
      %p33 = scmp.ne.s32.totalorder %s22, %s23
      %p34 = scmp.eq.s32.totalorder %s14, 0
      %p35 = por %p33, %p34
      %p36 = scmp.ne.s32.totalorder %s22, %s23
      %p37 = scmp.eq.s32.totalorder %s15, 1
      %p38 = por %p36, %p37
      %p40 = scmp.ne.s32.totalorder %s23, %s39
      %p41 = scmp.eq.s32.totalorder %s15, 0
      %p42 = por %p40, %p41
      %s44 = sadd.s32 %s43, 1
      %p47 = scmp.eq.s32.totalorder %s9, 1
      %p48 = scmp.ne.s32.totalorder %s43, %s45
      %p49 = scmp.eq.s32.totalorder %s9, 0
      %p50 = por %p48, %p49
      %p51 = scmp.ne.s32.totalorder %s43, %s45
      %p52 = scmp.eq.s32.totalorder %s14, 1
      %p53 = por %p51, %p52
      %p54 = scmp.ne.s32.totalorder %s45, %s46
      %p55 = scmp.eq.s32.totalorder %s14, 0
      %p56 = por %p54, %p55
      %p57 = scmp.ne.s32.totalorder %s45, %s46
      %p58 = scmp.eq.s32.totalorder %s15, 1
      %p59 = por %p57, %p58
      %p61 = scmp.ne.s32.totalorder %s46, %s60
      %p62 = scmp.eq.s32.totalorder %s15, 0
      %p63 = por %p61, %p62
      %s65 = sadd.s32 %s64, 1
      %p68 = scmp.eq.s32.totalorder %s9, 1
      %p69 = scmp.ne.s32.totalorder %s64, %s66
      %p70 = scmp.eq.s32.totalorder %s9, 0
      %p71 = por %p69, %p70
      %p72 = scmp.ne.s32.totalorder %s64, %s66
      %p73 = scmp.eq.s32.totalorder %s14, 1
      %p74 = por %p72, %p73
      %p75 = scmp.ne.s32.totalorder %s66, %s67
      %p76 = scmp.eq.s32.totalorder %s14, 0
      %p77 = por %p75, %p76
      %p78 = scmp.ne.s32.totalorder %s66, %s67
      %p79 = scmp.eq.s32.totalorder %s15, 1
      %p80 = por %p78, %p79
      %p82 = scmp.ne.s32.totalorder %s67, %s81
      %p83 = scmp.eq.s32.totalorder %s15, 0
      %p84 = por %p82, %p83
      %s85 = ssub.s32 %s9, %s16
      %p86 = scmp.eq.s32.totalorder %s85, 0
      %s88 = sadd.s32 %s87, 1
      %s89 = scalar_select %p86, %s87, %s88
      %p92 = pneg %p86
      %p93 = scmp.eq.s32.totalorder %s9, 1
      %p94 = por %p92, %p93
      %p95 = scmp.ne.s32.totalorder %s87, %s90
      %p96 = scmp.eq.s32.totalorder %s9, 0
      %p97 = por %p95, %p96
      %p98 = scmp.ne.s32.totalorder %s87, %s90
      %p99 = scmp.eq.s32.totalorder %s14, 1
      %p100 = por %p98, %p99
      %p101 = scmp.ne.s32.totalorder %s90, %s91
      %p102 = scmp.eq.s32.totalorder %s14, 0
      %p103 = por %p101, %p102
      %p104 = scmp.ne.s32.totalorder %s90, %s91
      %p105 = scmp.eq.s32.totalorder %s15, 1
      %p106 = por %p104, %p105
      %p108 = scmp.ne.s32.totalorder %s91, %s107
      %p109 = scmp.eq.s32.totalorder %s15, 0
      %p110 = por %p108, %p109
      %p111 = scmp.le.s32.totalorder 1, %s9
      %p112 = scmp.lt.s32.totalorder %s9, 3
      %p113 = pnand %p111, %p112
      %p114 = pneg %p113
      // Predicated region
      $region9: #{net_forward.3} parent=5 // pred_check
        _
      $region10: #{net_forward.3} parent=5 // pred_check_branch
        %116 = sbr.rel (%p113) target = $region12
      $region11: #{net_forward.3} parent=5 // pred_region
        %s117 = ssub.s32 %s9, 1
        // Predicated region
        $region13: #{net_forward.3} parent=11 // pred_check
          %p118 = pneg %p56
        $region14: #{net_forward.3} parent=11 // pred_check_branch
          %120 = sbr.rel (%p118) target = $region16
        $region15: #{net_forward.3} parent=11 // pred_region
          _
        $region16: #{net_forward.3} parent=11 // pred_fallthru
          _
        // Predicated region
        $region17: #{net_forward.3} parent=11 // pred_check
          %p121 = pneg %p77
        $region18: #{net_forward.3} parent=11 // pred_check_branch
          %123 = sbr.rel (%p121) target = $region20
        $region19: #{net_forward.3} parent=11 // pred_region
          _
        $region20: #{net_forward.3} parent=11 // pred_fallthru
          _
      $region12: #{net_forward.3} parent=5 // pred_fallthru
        _
      %p124 = scmp.lt.s32.totalorder %s9, 2
      // Predicated region
      $region21: #{net_forward.3} parent=5 // pred_check
        %p125 = pneg %p124
      $region22: #{net_forward.3} parent=5 // pred_check_branch
        %127 = sbr.rel (%p125) target = $region24
      $region23: #{net_forward.3} parent=5 // pred_region
        // Predicated region
        $region25: #{net_forward.3} parent=23 // pred_check
          %p128 = pneg %p29
        $region26: #{net_forward.3} parent=23 // pred_check_branch
          %130 = sbr.rel (%p128) target = $region28
        $region27: #{net_forward.3} parent=23 // pred_region
          %s131 = sand.u32 %s19, 1
          %s132 = sand.u32 %s19, 1
          %s133 = smul.addr %s132, 128
          %s134 = scalar_lea.vmem [#allocation2], %s133
          %s135 = smul.u32 2, %s9
          %s136 = smul.addr %s135, 4
          %s137 = scalar_lea.vmem %s0, %s136
          // Predicated region
          $region29: #{net_forward.3} parent=27 // pred_check
            _
          $region30: #{net_forward.3} parent=27 // pred_check_branch
            %139 = sbr.rel (0) target = $region32
          $region31: #{net_forward.3} parent=27 // pred_region
            // Predicated region
            $region33: #{net_forward.3} parent=31 // pred_check
              _
            $region34: #{net_forward.3} parent=31 // pred_check_branch
              %141 = sbr.rel (0) target = $region36
            $region35: #{net_forward.3} parent=31 // pred_region
              // Predicated region
              $region48: #{net_forward.3} parent=35 // pred_check
                _
              $region49: #{net_forward.3} parent=35 // pred_check_branch
                %186 = sbr.rel (0) target = $region51
              $region50: #{net_forward.3} parent=35 // pred_region
                loop: start=0, step=1, limit=1
                $region52: #{net_forward.3} parent=50 // loop_pre_header
                  _
                $region53: #{net_forward.3} parent=50 // loop_header
                  %s188 = sphi 0, %s192
                  %p189 = scmp.ge.s32.totalorder %s188, 1
                  %s193 = sphi %s137, %s137
                  %s194 = sphi %s134, %s134
                $region54: #{net_forward.3} parent=50 // loop_header_branch
                  %191 = sbr.rel (%p189) target = $region58
                $region55: #{net_forward.3} parent=50 // loop_body
                  %v195 = vld [vmem:[%s193] sm:$0xff]
                  %196 = vst [vmem:[%s194] sm:$0xff] %v195
                  %v197 = vld [vmem:[%s193 + $0x10] sm:$0xff]
                  %198 = vst [vmem:[%s194 + $0x8] sm:$0xff] %v197
                  %v199 = vld [vmem:[%s193 + $0x20] sm:$0xff]
                  %200 = vst [vmem:[%s194 + $0x10] sm:$0xff] %v199
                  %v201 = vld [vmem:[%s193 + $0x30] sm:$0xff]
                  %202 = vst [vmem:[%s194 + $0x18] sm:$0xff] %v201
                  %v203 = vld [vmem:[%s193 + $0x40] sm:$0xff]
                  %204 = vst [vmem:[%s194 + $0x20] sm:$0xff] %v203
                  %v205 = vld [vmem:[%s193 + $0x50] sm:$0xff]
                  %206 = vst [vmem:[%s194 + $0x28] sm:$0xff] %v205
                  %v207 = vld [vmem:[%s193 + $0x60] sm:$0xff]
                  %208 = vst [vmem:[%s194 + $0x30] sm:$0xff] %v207
                  %v209 = vld [vmem:[%s193 + $0x70] sm:$0xff]
                  %210 = vst [vmem:[%s194 + $0x38] sm:$0xff] %v209
                  %v211 = vld [vmem:[%s193 + $0x80] sm:$0xff]
                  %212 = vst [vmem:[%s194 + $0x40] sm:$0xff] %v211
                  %v213 = vld [vmem:[%s193 + $0x90] sm:$0xff]
                  %214 = vst [vmem:[%s194 + $0x48] sm:$0xff] %v213
                  %v215 = vld [vmem:[%s193 + $0xa0] sm:$0xff]
                  %216 = vst [vmem:[%s194 + $0x50] sm:$0xff] %v215
                  %v217 = vld [vmem:[%s193 + $0xb0] sm:$0xff]
                  %218 = vst [vmem:[%s194 + $0x58] sm:$0xff] %v217
                  %v219 = vld [vmem:[%s193 + $0xc0] sm:$0xff]
                  %220 = vst [vmem:[%s194 + $0x60] sm:$0xff] %v219
                  %v221 = vld [vmem:[%s193 + $0xd0] sm:$0xff]
                  %222 = vst [vmem:[%s194 + $0x68] sm:$0xff] %v221
                  %v223 = vld [vmem:[%s193 + $0xe0] sm:$0xff]
                  %224 = vst [vmem:[%s194 + $0x70] sm:$0xff] %v223
                  %v225 = vld [vmem:[%s193 + $0xf0] sm:$0xff]
                  %226 = vst [vmem:[%s194 + $0x78] sm:$0xff] %v225
                $region56: #{net_forward.3} parent=50 // loop_footer
                  %s192 = sadd.s32 1, %s188
                $region57: #{net_forward.3} parent=50 // loop_footer_branch
                  %187 = sbr.rel target = $region53
                $region58: #{net_forward.3} parent=50 // loop_exit
                  _
              $region51: #{net_forward.3} parent=35 // pred_fallthru
                _
              // Predicated region
              $region59: #{net_forward.3} parent=35 // pred_check
                _
              $region60: #{net_forward.3} parent=35 // pred_check_branch
                %228 = sbr.rel target = $region62
              $region61: #{net_forward.3} parent=35 // pred_region
                _
              $region62: #{net_forward.3} parent=35 // pred_fallthru
                _
            $region36: #{net_forward.3} parent=31 // pred_fallthru
              _
            // Predicated region
            $region37: #{net_forward.3} parent=31 // pred_check
              _
            $region38: #{net_forward.3} parent=31 // pred_check_branch
              %143 = sbr.rel target = $region40
            $region39: #{net_forward.3} parent=31 // pred_region
              loop: start=0, step=1, limit=1
              $region41: #{net_forward.3} parent=39 // loop_pre_header
                _
              $region42: #{net_forward.3} parent=39 // loop_header
                %s146 = sphi 0, %s150
                %p147 = scmp.ge.s32.totalorder %s146, 1
                %s151 = sphi %s137, %s137
                %s152 = sphi %s134, %s134
              $region43: #{net_forward.3} parent=39 // loop_header_branch
                %149 = sbr.rel (%p147) target = $region47
              $region44: #{net_forward.3} parent=39 // loop_body
                %v153 = vld [vmem:[%s151] sm:$0xff]
                %154 = vst [vmem:[%s152] sm:$0xff] %v153
                %v155 = vld [vmem:[%s151 + $0x10] sm:$0xff]
                %156 = vst [vmem:[%s152 + $0x8] sm:$0xff] %v155
                %v157 = vld [vmem:[%s151 + $0x20] sm:$0xff]
                %158 = vst [vmem:[%s152 + $0x10] sm:$0xff] %v157
                %v159 = vld [vmem:[%s151 + $0x30] sm:$0xff]
                %160 = vst [vmem:[%s152 + $0x18] sm:$0xff] %v159
                %v161 = vld [vmem:[%s151 + $0x40] sm:$0xff]
                %162 = vst [vmem:[%s152 + $0x20] sm:$0xff] %v161
                %v163 = vld [vmem:[%s151 + $0x50] sm:$0xff]
                %164 = vst [vmem:[%s152 + $0x28] sm:$0xff] %v163
                %v165 = vld [vmem:[%s151 + $0x60] sm:$0xff]
                %166 = vst [vmem:[%s152 + $0x30] sm:$0xff] %v165
                %v167 = vld [vmem:[%s151 + $0x70] sm:$0xff]
                %168 = vst [vmem:[%s152 + $0x38] sm:$0xff] %v167
                %v169 = vld [vmem:[%s151 + $0x80] sm:$0xff]
                %170 = vst [vmem:[%s152 + $0x40] sm:$0xff] %v169
                %v171 = vld [vmem:[%s151 + $0x90] sm:$0xff]
                %172 = vst [vmem:[%s152 + $0x48] sm:$0xff] %v171
                %v173 = vld [vmem:[%s151 + $0xa0] sm:$0xff]
                %174 = vst [vmem:[%s152 + $0x50] sm:$0xff] %v173
                %v175 = vld [vmem:[%s151 + $0xb0] sm:$0xff]
                %176 = vst [vmem:[%s152 + $0x58] sm:$0xff] %v175
                %v177 = vld [vmem:[%s151 + $0xc0] sm:$0xff]
                %178 = vst [vmem:[%s152 + $0x60] sm:$0xff] %v177
                %v179 = vld [vmem:[%s151 + $0xd0] sm:$0xff]
                %180 = vst [vmem:[%s152 + $0x68] sm:$0xff] %v179
                %v181 = vld [vmem:[%s151 + $0xe0] sm:$0xff]
                %182 = vst [vmem:[%s152 + $0x70] sm:$0xff] %v181
                %v183 = vld [vmem:[%s151 + $0xf0] sm:$0xff]
                %184 = vst [vmem:[%s152 + $0x78] sm:$0xff] %v183
              $region45: #{net_forward.3} parent=39 // loop_footer
                %s150 = sadd.s32 1, %s146
              $region46: #{net_forward.3} parent=39 // loop_footer_branch
                %145 = sbr.rel target = $region42
              $region47: #{net_forward.3} parent=39 // loop_exit
                _
            $region40: #{net_forward.3} parent=31 // pred_fallthru
              _
          $region32: #{net_forward.3} parent=27 // pred_fallthru
            _
          %229 = vnop
        $region28: #{net_forward.3} parent=23 // pred_fallthru
          _
      $region24: #{net_forward.3} parent=5 // pred_fallthru
        _
      %p230 = scmp.le.s32.totalorder 1, %s9
      %p231 = scmp.lt.s32.totalorder %s9, 3
      %p232 = pnand %p230, %p231
      %p233 = pneg %p232
      // Predicated region
      $region63: #{net_forward.3} parent=5 // pred_check
        _
      $region64: #{net_forward.3} parent=5 // pred_check_branch
        %235 = sbr.rel (%p232) target = $region66
      $region65: #{net_forward.3} parent=5 // pred_region
        %s236 = ssub.s32 %s9, 1
        %s237 = sand.u32 %s22, 1
        %s238 = sand.u32 %s22, 1
        %s239 = smul.addr %s238, 128
        %s240 = scalar_lea.vmem [#allocation2], %s239
        // Predicated region
        $region67: #{net_forward.3} parent=65 // pred_check
          %p241 = pneg %p35
        $region68: #{net_forward.3} parent=65 // pred_check_branch
          %243 = sbr.rel (%p241) target = $region70
        $region69: #{net_forward.3} parent=65 // pred_region
          _
        $region70: #{net_forward.3} parent=65 // pred_fallthru
          _
        %s244 = sand.u32 %s22, 1
        %s245 = sand.u32 %s22, 1
        %s246 = smul.addr %s245, 128
        %s247 = scalar_lea.vmem [#allocation2], %s246
        %p248 = pneg %p35
        %p249 = pneg %p32
        %p250 = pneg %p56
        %p251 = pneg %p53
        %p252 = pneg %p77
        %p253 = pneg %p74
        %p254 = pneg %p103
        %p255 = pneg %p100
        %s256 = sand.u32 %s90, 1
        %s257 = sand.u32 %s90, 1
        %s258 = smul.addr %s257, 16
        %s259 = scalar_lea.vmem [#allocation3], %s258
        %s260 = smul.u32 2, %s14
        %s261 = smul.u32 2, %s14
        %v263 = vld [vmem:[%s1] sm:$0xf]
        %v264 = vld [vmem:[%s1 + $0x4] sm:$0x1]
        %v265 = vld [vmem:[%s240] sm:$0xff]
        %v266 = vld [vmem:[%s240 + $0x8] sm:$0xff]
        %v267 = vld [vmem:[%s240 + $0x10] sm:$0xff]
        %v268 = vld [vmem:[%s240 + $0x18] sm:$0x11]
        %v271 = vunpack.c.l.b16 %v263
        %v272 = vunpack.c.l.b16 %v264
        %v273 = vpack.c.b16 %v272, %v271
        %v278 = vunpack.c.l.b16 %v265
        %v279 = vunpack.c.h.b16 %v265
        %v280 = vunpack.c.l.b16 %v266
        %v281 = vunpack.c.h.b16 %v266
        %v282 = vunpack.c.l.b16 %v267
        %v283 = vunpack.c.h.b16 %v267
        %v284 = vunpack.c.l.b16 %v268
        %v285 = vunpack.c.h.b16 %v268
        %v286 = vpack.c.b16 %v280, %v278
        %v287 = vpack.c.b16 %v281, %v279
        %v288 = vpack.c.b16 %v284, %v282
        %v289 = vpack.c.b16 %v285, %v283
        %vm292 = vcmask 203776
        %v294 = vsel %vm292, %v273, 0
        %vm296 = vcmask 1043456
        %vm297 = vcmask 1044480
        %v298 = vsel %vm296, 4294967295, 65535
        %v299 = vsel %vm297, %v298, 0
        %v301 = vand.u32 %v288, %v299
        %v304 = vand.u32 %v289, %v299
        %306 = vmatprep.subr.bf16.mxu0 %v287
        %307 = vmatpush1.bf16.msra.mxu0 %v286
        %308 = vmatprep.subr.bf16.mxu0 %v304
        %309 = vmatpush1.bf16.msra.mxu0 %v301
        %310 = vmatprep.subr.bf16.mxu0 0
        %311 = vmatpush1.bf16.msra.mxu0 0
        %312 = vmatprep.subr.bf16.mxu0 0
        %313 = vmatpush1.bf16.msra.mxu0 0
        %314 = vmatprep.subr.bf16.mxu0 0
        %315 = vmatpush1.bf16.msra.mxu0 0
        %316 = vmatprep.subr.bf16.mxu0 0
        %317 = vmatpush1.bf16.msra.mxu0 0
        %318 = vmatprep.subr.bf16.mxu0 0
        %319 = vmatpush1.bf16.msra.mxu0 0
        %320 = vmatprep.subr.bf16.mxu0 0
        %321 = vmatpush1.bf16.msra.mxu0 0
        %322 = vmatprep.subr.bf16.mxu0 0
        %323 = vmatpush1.bf16.msra.mxu0 0
        %324 = vmatprep.subr.bf16.mxu0 0
        %325 = vmatpush1.bf16.msra.mxu0 0
        %326 = vmatprep.subr.bf16.mxu0 0
        %327 = vmatpush1.bf16.msra.mxu0 0
        %328 = vmatprep.subr.bf16.mxu0 0
        %329 = vmatpush1.bf16.msra.mxu0 0
        %330 = vmatprep.subr.bf16.mxu0 0
        %331 = vmatpush1.bf16.msra.mxu0 0
        %332 = vmatprep.subr.bf16.mxu0 0
        %333 = vmatpush1.bf16.msra.mxu0 0
        %334 = vmatprep.subr.bf16.mxu0 0
        %335 = vmatpush1.bf16.msra.mxu0 0
        %336 = vmatprep.subr.bf16.mxu0 0
        %337 = vmatpush1.bf16.msra.mxu0 0
        %338 = vmatprep.mubr.bf16.mxu0 0
        %339 = vmatmul.mubr.bf16.gmra.mrb[0].mxu0 %v294
        %v340 = vpop.f32.mrb[0].mxu0
        %v341 = vadd.f32 0.0, %v340
        %v342 = vpop.f32.mrb[0].mxu0
        %v343 = vadd.f32 0.0, %v342
        %v344 = vpop.f32.mrb[0].mxu0
        %v345 = vadd.f32 0.0, %v344
        %v346 = vpop.f32.mrb[0].mxu0
        %v347 = vadd.f32 0.0, %v346
        %348 = vdwg.mxu0
        %s349 = scalar_lea.vmem %s240, 32 [#allocation2]
        %v350 = vld [vmem:[%s349] sm:$0xff]
        %v351 = vld [vmem:[%s349 + $0x8] sm:$0xff]
        %v352 = vld [vmem:[%s349 + $0x10] sm:$0xff]
        %v353 = vld [vmem:[%s349 + $0x18] sm:$0x11]
        %v358 = vunpack.c.l.b16 %v350
        %v359 = vunpack.c.h.b16 %v350
        %v360 = vunpack.c.l.b16 %v351
        %v361 = vunpack.c.h.b16 %v351
        %v362 = vunpack.c.l.b16 %v352
        %v363 = vunpack.c.h.b16 %v352
        %v364 = vunpack.c.l.b16 %v353
        %v365 = vunpack.c.h.b16 %v353
        %v366 = vpack.c.b16 %v360, %v358
        %v367 = vpack.c.b16 %v361, %v359
        %v368 = vpack.c.b16 %v364, %v362
        %v369 = vpack.c.b16 %v365, %v363
        %v373 = vand.u32 %v368, %v299
        %v376 = vand.u32 %v369, %v299
        %378 = vmatprep.subr.bf16.mxu0 %v367
        %379 = vmatpush1.bf16.msra.mxu0 %v366
        %380 = vmatprep.subr.bf16.mxu0 %v376
        %381 = vmatpush1.bf16.msra.mxu0 %v373
        %382 = vmatprep.subr.bf16.mxu0 0
        %383 = vmatpush1.bf16.msra.mxu0 0
        %384 = vmatprep.subr.bf16.mxu0 0
        %385 = vmatpush1.bf16.msra.mxu0 0
        %386 = vmatprep.subr.bf16.mxu0 0
        %387 = vmatpush1.bf16.msra.mxu0 0
        %388 = vmatprep.subr.bf16.mxu0 0
        %389 = vmatpush1.bf16.msra.mxu0 0
        %390 = vmatprep.subr.bf16.mxu0 0
        %391 = vmatpush1.bf16.msra.mxu0 0
        %392 = vmatprep.subr.bf16.mxu0 0
        %393 = vmatpush1.bf16.msra.mxu0 0
        %394 = vmatprep.subr.bf16.mxu0 0
        %395 = vmatpush1.bf16.msra.mxu0 0
        %396 = vmatprep.subr.bf16.mxu0 0
        %397 = vmatpush1.bf16.msra.mxu0 0
        %398 = vmatprep.subr.bf16.mxu0 0
        %399 = vmatpush1.bf16.msra.mxu0 0
        %400 = vmatprep.subr.bf16.mxu0 0
        %401 = vmatpush1.bf16.msra.mxu0 0
        %402 = vmatprep.subr.bf16.mxu0 0
        %403 = vmatpush1.bf16.msra.mxu0 0
        %404 = vmatprep.subr.bf16.mxu0 0
        %405 = vmatpush1.bf16.msra.mxu0 0
        %406 = vmatprep.subr.bf16.mxu0 0
        %407 = vmatpush1.bf16.msra.mxu0 0
        %408 = vmatprep.subr.bf16.mxu0 0
        %409 = vmatpush1.bf16.msra.mxu0 0
        %410 = vmatprep.mubr.bf16.mxu0 0
        %411 = vmatmul.mubr.bf16.gmra.mrb[0].mxu0 %v294
        %v412 = vpop.f32.mrb[0].mxu0
        %v413 = vadd.f32 0.0, %v412
        %v414 = vpop.f32.mrb[0].mxu0
        %v415 = vadd.f32 0.0, %v414
        %v416 = vpop.f32.mrb[0].mxu0
        %v417 = vadd.f32 0.0, %v416
        %v418 = vpop.f32.mrb[0].mxu0
        %v419 = vadd.f32 0.0, %v418
        %420 = vdwg.mxu0
        %v421 = vmax.f32 %v341, %v413
        %v422 = vmax.f32 %v343, %v415
        %v423 = vmax.f32 %v345, %v417
        %v424 = vmax.f32 %v347, %v419
        %s425 = scalar_lea.vmem %s240, 64 [#allocation2]
        %v426 = vld [vmem:[%s425] sm:$0xff]
        %v427 = vld [vmem:[%s425 + $0x8] sm:$0xff]
        %v428 = vld [vmem:[%s425 + $0x10] sm:$0xff]
        %v429 = vld [vmem:[%s425 + $0x18] sm:$0x11]
        %v434 = vunpack.c.l.b16 %v426
        %v435 = vunpack.c.h.b16 %v426
        %v436 = vunpack.c.l.b16 %v427
        %v437 = vunpack.c.h.b16 %v427
        %v438 = vunpack.c.l.b16 %v428
        %v439 = vunpack.c.h.b16 %v428
        %v440 = vunpack.c.l.b16 %v429
        %v441 = vunpack.c.h.b16 %v429
        %v442 = vpack.c.b16 %v436, %v434
        %v443 = vpack.c.b16 %v437, %v435
        %v444 = vpack.c.b16 %v440, %v438
        %v445 = vpack.c.b16 %v441, %v439
        %v449 = vand.u32 %v444, %v299
        %v452 = vand.u32 %v445, %v299
        %454 = vmatprep.subr.bf16.mxu0 %v443
        %455 = vmatpush1.bf16.msra.mxu0 %v442
        %456 = vmatprep.subr.bf16.mxu0 %v452
        %457 = vmatpush1.bf16.msra.mxu0 %v449
        %458 = vmatprep.subr.bf16.mxu0 0
        %459 = vmatpush1.bf16.msra.mxu0 0
        %460 = vmatprep.subr.bf16.mxu0 0
        %461 = vmatpush1.bf16.msra.mxu0 0
        %462 = vmatprep.subr.bf16.mxu0 0
        %463 = vmatpush1.bf16.msra.mxu0 0
        %464 = vmatprep.subr.bf16.mxu0 0
        %465 = vmatpush1.bf16.msra.mxu0 0
        %466 = vmatprep.subr.bf16.mxu0 0
        %467 = vmatpush1.bf16.msra.mxu0 0
        %468 = vmatprep.subr.bf16.mxu0 0
        %469 = vmatpush1.bf16.msra.mxu0 0
        %470 = vmatprep.subr.bf16.mxu0 0
        %471 = vmatpush1.bf16.msra.mxu0 0
        %472 = vmatprep.subr.bf16.mxu0 0
        %473 = vmatpush1.bf16.msra.mxu0 0
        %474 = vmatprep.subr.bf16.mxu0 0
        %475 = vmatpush1.bf16.msra.mxu0 0
        %476 = vmatprep.subr.bf16.mxu0 0
        %477 = vmatpush1.bf16.msra.mxu0 0
        %478 = vmatprep.subr.bf16.mxu0 0
        %479 = vmatpush1.bf16.msra.mxu0 0
        %480 = vmatprep.subr.bf16.mxu0 0
        %481 = vmatpush1.bf16.msra.mxu0 0
        %482 = vmatprep.subr.bf16.mxu0 0
        %483 = vmatpush1.bf16.msra.mxu0 0
        %484 = vmatprep.subr.bf16.mxu0 0
        %485 = vmatpush1.bf16.msra.mxu0 0
        %486 = vmatprep.mubr.bf16.mxu0 0
        %487 = vmatmul.mubr.bf16.gmra.mrb[0].mxu0 %v294
        %v488 = vpop.f32.mrb[0].mxu0
        %v489 = vadd.f32 0.0, %v488
        %v490 = vpop.f32.mrb[0].mxu0
        %v491 = vadd.f32 0.0, %v490
        %v492 = vpop.f32.mrb[0].mxu0
        %v493 = vadd.f32 0.0, %v492
        %v494 = vpop.f32.mrb[0].mxu0
        %v495 = vadd.f32 0.0, %v494
        %496 = vdwg.mxu0
        %v497 = vmax.f32 %v421, %v489
        %v498 = vmax.f32 %v422, %v491
        %v499 = vmax.f32 %v423, %v493
        %v500 = vmax.f32 %v424, %v495
        %s501 = scalar_lea.vmem %s240, 96 [#allocation2]
        %v502 = vld [vmem:[%s501] sm:$0xff]
        %v503 = vld [vmem:[%s501 + $0x8] sm:$0xff]
        %v504 = vld [vmem:[%s501 + $0x10] sm:$0xff]
        %v505 = vld [vmem:[%s501 + $0x18] sm:$0x11]
        %v510 = vunpack.c.l.b16 %v502
        %v511 = vunpack.c.h.b16 %v502
        %v512 = vunpack.c.l.b16 %v503
        %v513 = vunpack.c.h.b16 %v503
        %v514 = vunpack.c.l.b16 %v504
        %v515 = vunpack.c.h.b16 %v504
        %v516 = vunpack.c.l.b16 %v505
        %v517 = vunpack.c.h.b16 %v505
        %v518 = vpack.c.b16 %v512, %v510
        %v519 = vpack.c.b16 %v513, %v511
        %v520 = vpack.c.b16 %v516, %v514
        %v521 = vpack.c.b16 %v517, %v515
        %v525 = vand.u32 %v520, %v299
        %v528 = vand.u32 %v521, %v299
        %530 = vmatprep.subr.bf16.mxu0 %v519
        %531 = vmatpush1.bf16.msra.mxu0 %v518
        %532 = vmatprep.subr.bf16.mxu0 %v528
        %533 = vmatpush1.bf16.msra.mxu0 %v525
        %534 = vmatprep.subr.bf16.mxu0 0
        %535 = vmatpush1.bf16.msra.mxu0 0
        %536 = vmatprep.subr.bf16.mxu0 0
        %537 = vmatpush1.bf16.msra.mxu0 0
        %538 = vmatprep.subr.bf16.mxu0 0
        %539 = vmatpush1.bf16.msra.mxu0 0
        %540 = vmatprep.subr.bf16.mxu0 0
        %541 = vmatpush1.bf16.msra.mxu0 0
        %542 = vmatprep.subr.bf16.mxu0 0
        %543 = vmatpush1.bf16.msra.mxu0 0
        %544 = vmatprep.subr.bf16.mxu0 0
        %545 = vmatpush1.bf16.msra.mxu0 0
        %546 = vmatprep.subr.bf16.mxu0 0
        %547 = vmatpush1.bf16.msra.mxu0 0
        %548 = vmatprep.subr.bf16.mxu0 0
        %549 = vmatpush1.bf16.msra.mxu0 0
        %550 = vmatprep.subr.bf16.mxu0 0
        %551 = vmatpush1.bf16.msra.mxu0 0
        %552 = vmatprep.subr.bf16.mxu0 0
        %553 = vmatpush1.bf16.msra.mxu0 0
        %554 = vmatprep.subr.bf16.mxu0 0
        %555 = vmatpush1.bf16.msra.mxu0 0
        %556 = vmatprep.subr.bf16.mxu0 0
        %557 = vmatpush1.bf16.msra.mxu0 0
        %558 = vmatprep.subr.bf16.mxu0 0
        %559 = vmatpush1.bf16.msra.mxu0 0
        %560 = vmatprep.subr.bf16.mxu0 0
        %561 = vmatpush1.bf16.msra.mxu0 0
        %562 = vmatprep.mubr.bf16.mxu0 0
        %563 = vmatmul.mubr.bf16.gmra.mrb[0].mxu0 %v294
        %v564 = vpop.f32.mrb[0].mxu0
        %v565 = vadd.f32 0.0, %v564
        %v566 = vpop.f32.mrb[0].mxu0
        %v567 = vadd.f32 0.0, %v566
        %v568 = vpop.f32.mrb[0].mxu0
        %v569 = vadd.f32 0.0, %v568
        %v570 = vpop.f32.mrb[0].mxu0
        %v571 = vadd.f32 0.0, %v570
        %572 = vdwg.mxu0
        %v573 = vmax.f32 %v497, %v565
        %v574 = vmax.f32 %v498, %v567
        %v575 = vmax.f32 %v499, %v569
        %v576 = vmax.f32 %v500, %v571
        %v577 = vld [vmem:[%s2] sm:$0xff]
        %v578 = vld [vmem:[%s2 + $0x8] sm:$0x3]
        %580 = vset.pattern.permute.xlu0 0
        %581 = vperm.xlu0 %580, %v577
        %v582 = vpop.permute.xlu0 %581
        %585 = vset.pattern.permute.xlu0 0
        %586 = vperm.xlu0 %585, %v578
        %v587 = vpop.permute.xlu0 %586
        %v589 = vadd.f32 %v573, %v582
        %v590 = vadd.f32 %v574, %v582
        %v591 = vadd.f32 %v575, %v587
        %v592 = vadd.f32 %v576, %v587
        %v593 = vmax.f32 %v589, 0.0
        %v594 = vmax.f32 %v590, 0.0
        %v595 = vmax.f32 %v591, 0.0
        %v596 = vmax.f32 %v592, 0.0
        %v597 = vpack.c.bf16 %v595, %v593
        %v598 = vpack.c.bf16 %v596, %v594
        %v601 = vunpack.c.l.b16 %v597
        %v602 = vunpack.c.l.b16 %v598
        %v603 = vunpack.c.h.b16 %v597
        %v604 = vunpack.c.h.b16 %v598
        %v605 = vpack.c.b16 %v602, %v601
        %v606 = vpack.c.b16 %v604, %v603
        %609 = vst [vmem:[%s259] sm:$0xff] %v605
        %610 = vst [vmem:[%s259 + $0x8] sm:$0x11] %v606
        %s611 = sand.u32 %s90, 1
        %s612 = sand.u32 %s90, 1
        %s613 = smul.addr %s612, 16
        %s614 = scalar_lea.vmem [#allocation3], %s613
        // Predicated region
        $region71: #{net_forward.3} parent=65 // pred_check
          %p615 = pneg %p100
        $region72: #{net_forward.3} parent=65 // pred_check_branch
          %617 = sbr.rel (%p615) target = $region74
        $region73: #{net_forward.3} parent=65 // pred_region
          %s618 = smul.u32 2, %s14
          %s619 = smul.addr %s618, 4
          %s620 = scalar_lea.vmem %s3, %s619
          // Predicated region
          $region75: #{net_forward.3} parent=73 // pred_check
            _
          $region76: #{net_forward.3} parent=73 // pred_check_branch
            %622 = sbr.rel (0) target = $region78
          $region77: #{net_forward.3} parent=73 // pred_region
            // Predicated region
            $region79: #{net_forward.3} parent=77 // pred_check
              _
            $region80: #{net_forward.3} parent=77 // pred_check_branch
              %624 = sbr.rel (0) target = $region82
            $region81: #{net_forward.3} parent=77 // pred_region
              // Predicated region
              $region94: #{net_forward.3} parent=81 // pred_check
                _
              $region95: #{net_forward.3} parent=81 // pred_check_branch
                %641 = sbr.rel (0) target = $region97
              $region96: #{net_forward.3} parent=81 // pred_region
                loop: start=0, step=1, limit=1
                $region98: #{net_forward.3} parent=96 // loop_pre_header
                  _
                $region99: #{net_forward.3} parent=96 // loop_header
                  %s643 = sphi 0, %s647
                  %p644 = scmp.ge.s32.totalorder %s643, 1
                  %s648 = sphi %s614, %s614
                  %s649 = sphi %s620, %s620
                $region100: #{net_forward.3} parent=96 // loop_header_branch
                  %646 = sbr.rel (%p644) target = $region104
                $region101: #{net_forward.3} parent=96 // loop_body
                  %v650 = vld [vmem:[%s648] sm:$0xff]
                  %651 = vst [vmem:[%s649] sm:$0xff] %v650
                  %v652 = vld [vmem:[%s648 + $0x8] sm:$0xff]
                  %653 = vst [vmem:[%s649 + $0x10] sm:$0xff] %v652
                $region102: #{net_forward.3} parent=96 // loop_footer
                  %s647 = sadd.s32 1, %s643
                $region103: #{net_forward.3} parent=96 // loop_footer_branch
                  %642 = sbr.rel target = $region99
                $region104: #{net_forward.3} parent=96 // loop_exit
                  _
              $region97: #{net_forward.3} parent=81 // pred_fallthru
                _
              // Predicated region
              $region105: #{net_forward.3} parent=81 // pred_check
                _
              $region106: #{net_forward.3} parent=81 // pred_check_branch
                %655 = sbr.rel target = $region108
              $region107: #{net_forward.3} parent=81 // pred_region
                _
              $region108: #{net_forward.3} parent=81 // pred_fallthru
                _
            $region82: #{net_forward.3} parent=77 // pred_fallthru
              _
            // Predicated region
            $region83: #{net_forward.3} parent=77 // pred_check
              _
            $region84: #{net_forward.3} parent=77 // pred_check_branch
              %626 = sbr.rel target = $region86
            $region85: #{net_forward.3} parent=77 // pred_region
              loop: start=0, step=1, limit=1
              $region87: #{net_forward.3} parent=85 // loop_pre_header
                _
              $region88: #{net_forward.3} parent=85 // loop_header
                %s629 = sphi 0, %s633
                %p630 = scmp.ge.s32.totalorder %s629, 1
                %s634 = sphi %s614, %s614
                %s635 = sphi %s620, %s620
              $region89: #{net_forward.3} parent=85 // loop_header_branch
                %632 = sbr.rel (%p630) target = $region93
              $region90: #{net_forward.3} parent=85 // loop_body
                %v636 = vld [vmem:[%s634] sm:$0xff]
                %637 = vst [vmem:[%s635] sm:$0xff] %v636
                %v638 = vld [vmem:[%s634 + $0x8] sm:$0xff]
                %639 = vst [vmem:[%s635 + $0x10] sm:$0xff] %v638
              $region91: #{net_forward.3} parent=85 // loop_footer
                %s633 = sadd.s32 1, %s629
              $region92: #{net_forward.3} parent=85 // loop_footer_branch
                %628 = sbr.rel target = $region88
              $region93: #{net_forward.3} parent=85 // loop_exit
                _
            $region86: #{net_forward.3} parent=77 // pred_fallthru
              _
          $region78: #{net_forward.3} parent=73 // pred_fallthru
            _
          %656 = vnop
        $region74: #{net_forward.3} parent=65 // pred_fallthru
          _
      $region66: #{net_forward.3} parent=5 // pred_fallthru
        _
      %p657 = scmp.le.s32.totalorder 2, %s9
      // Predicated region
      $region109: #{net_forward.3} parent=5 // pred_check
        %p658 = pneg %p657
      $region110: #{net_forward.3} parent=5 // pred_check_branch
        %660 = sbr.rel (%p658) target = $region112
      $region111: #{net_forward.3} parent=5 // pred_region
        %s661 = ssub.s32 %s9, 2
        // Predicated region
        $region113: #{net_forward.3} parent=111 // pred_check
          %p662 = pneg %p106
        $region114: #{net_forward.3} parent=111 // pred_check_branch
          %664 = sbr.rel (%p662) target = $region116
        $region115: #{net_forward.3} parent=111 // pred_region
          %s665 = sand.u32 %s91, 1
          %s666 = sand.u32 %s91, 1
          %s667 = smul.addr %s666, 16
          %s668 = scalar_lea.vmem [#allocation3], %s667
        $region116: #{net_forward.3} parent=111 // pred_fallthru
          _
      $region112: #{net_forward.3} parent=5 // pred_fallthru
        _
    $region6: #{net_forward.3} parent=1 // loop_footer
      %s13 = sadd.s32 1, %s9
    $region7: #{net_forward.3} parent=1 // loop_footer_branch
      %8 = sbr.rel target = $region3
    $region8: #{net_forward.3} parent=1 // loop_exit
      _

// kernel: net_forward.4
$region0: #{net_forward.4}
  #allocation0 [shape = 'u32[]', space=smem, size = 0x4, offset = 0x4, fixed_abs, tag = 'smem constant byte address 0x4 - core index']
  #allocation1 [shape = 'u32[144,128]{1,0:T(1,128)}', space=vmem, size = 0x12000, scoped, tag = 'internal scratch']
  %s0 = inlined_call_operand.vmem [shape: bf16[4,250,128], index: 0, kind: input, shape index: {}]
  %s1 = inlined_call_operand.vmem [shape: bf16[20,250], index: 1, kind: input, shape index: {}]
  %s2 = inlined_call_operand.vmem [shape: f32[20,1], index: 2, kind: input, shape index: {}]
  %s3 = inlined_call_operand.vmem [shape: bf16[20,128], index: 3, kind: output, shape index: {}]
  %s4 = sld [smem:[#allocation0]]
  $region22: #{net_forward.4} parent=0
    _
  %s6 = ssub.s32 1, %s4
  %s7 = scalar_select 0, %s6, %s4
  // Predicated region
  $region2: #{net_forward.4} parent=0 // pred_check
    _
  $region3: #{net_forward.4} parent=0 // pred_check_branch
    %9 = sbr.rel (0) target = $region5
  $region4: #{net_forward.4} parent=0 // pred_region
    _
  $region5: #{net_forward.4} parent=0 // pred_fallthru
    _
  // Predicated region
  $region6: #{net_forward.4} parent=0 // pred_check
    _
  $region7: #{net_forward.4} parent=0 // pred_check_branch
    %11 = sbr.rel (0) target = $region9
  $region8: #{net_forward.4} parent=0 // pred_region
    _
  $region9: #{net_forward.4} parent=0 // pred_fallthru
    _
  // Predicated region
  $region10: #{net_forward.4} parent=0 // pred_check
    _
  $region11: #{net_forward.4} parent=0 // pred_check_branch
    %13 = sbr.rel (0) target = $region13
  $region12: #{net_forward.4} parent=0 // pred_region
    _
  $region13: #{net_forward.4} parent=0 // pred_fallthru
    _
  %v15 = vld [vmem:[%s1] sm:$0xff]
  %v16 = vld [vmem:[%s1 + $0x8] sm:$0xff]
  %v17 = vld [vmem:[%s1 + $0x10] sm:$0x33]
  %v18 = vld [vmem:[%s0] sm:$0xf]
  %v19 = vld [vmem:[%s0 + $0x4] sm:$0xf]
  %v20 = vld [vmem:[%s0 + $0x8] sm:$0xf]
  %v21 = vld [vmem:[%s0 + $0xc] sm:$0xf]
  %v22 = vld [vmem:[%s0 + $0x10] sm:$0xf]
  %v23 = vld [vmem:[%s0 + $0x14] sm:$0xf]
  %v24 = vld [vmem:[%s0 + $0x18] sm:$0xf]
  %v25 = vld [vmem:[%s0 + $0x1c] sm:$0xf]
  %v26 = vld [vmem:[%s0 + $0x20] sm:$0xf]
  %v27 = vld [vmem:[%s0 + $0x24] sm:$0xf]
  %v28 = vld [vmem:[%s0 + $0x28] sm:$0xf]
  %v29 = vld [vmem:[%s0 + $0x2c] sm:$0xf]
  %v30 = vld [vmem:[%s0 + $0x30] sm:$0xf]
  %v31 = vld [vmem:[%s0 + $0x34] sm:$0xf]
  %v32 = vld [vmem:[%s0 + $0x38] sm:$0xf]
  %v33 = vld [vmem:[%s0 + $0x3c] sm:$0xf]
  %v34 = vld [vmem:[%s0 + $0x40] sm:$0xf]
  %v35 = vld [vmem:[%s0 + $0x44] sm:$0xf]
  %v36 = vld [vmem:[%s0 + $0x48] sm:$0xf]
  %v37 = vld [vmem:[%s0 + $0x4c] sm:$0xf]
  %v38 = vld [vmem:[%s0 + $0x50] sm:$0xf]
  %v39 = vld [vmem:[%s0 + $0x54] sm:$0xf]
  %v40 = vld [vmem:[%s0 + $0x58] sm:$0xf]
  %v41 = vld [vmem:[%s0 + $0x5c] sm:$0xf]
  %v42 = vld [vmem:[%s0 + $0x60] sm:$0xf]
  %v43 = vld [vmem:[%s0 + $0x64] sm:$0xf]
  %v44 = vld [vmem:[%s0 + $0x68] sm:$0xf]
  %v45 = vld [vmem:[%s0 + $0x6c] sm:$0xf]
  %v46 = vld [vmem:[%s0 + $0x70] sm:$0xf]
  %v47 = vld [vmem:[%s0 + $0x74] sm:$0xf]
  %v48 = vld [vmem:[%s0 + $0x78] sm:$0xf]
  %v49 = vld [vmem:[%s0 + $0x7c] sm:$0x1]
  %v53 = vunpack.c.l.b16 %v15
  %v54 = vunpack.c.h.b16 %v15
  %v55 = vunpack.c.l.b16 %v16
  %v56 = vunpack.c.h.b16 %v16
  %v57 = vunpack.c.l.b16 %v17
  %v58 = vunpack.c.h.b16 %v17
  %v59 = vpack.c.b16 %v55, %v53
  %v60 = vpack.c.b16 %v56, %v54
  %v61 = vpack.c.b16 %v57, %v57
  %v62 = vpack.c.b16 %v58, %v58
  %v97 = vunpack.c.l.b16 %v18
  %v98 = vunpack.c.l.b16 %v19
  %v99 = vunpack.c.l.b16 %v20
  %v100 = vunpack.c.l.b16 %v21
  %v101 = vunpack.c.l.b16 %v22
  %v102 = vunpack.c.l.b16 %v23
  %v103 = vunpack.c.l.b16 %v24
  %v104 = vunpack.c.l.b16 %v25
  %v105 = vunpack.c.l.b16 %v26
  %v106 = vunpack.c.l.b16 %v27
  %v107 = vunpack.c.l.b16 %v28
  %v108 = vunpack.c.l.b16 %v29
  %v109 = vunpack.c.l.b16 %v30
  %v110 = vunpack.c.l.b16 %v31
  %v111 = vunpack.c.l.b16 %v32
  %v112 = vunpack.c.l.b16 %v33
  %v113 = vunpack.c.l.b16 %v34
  %v114 = vunpack.c.l.b16 %v35
  %v115 = vunpack.c.l.b16 %v36
  %v116 = vunpack.c.l.b16 %v37
  %v117 = vunpack.c.l.b16 %v38
  %v118 = vunpack.c.l.b16 %v39
  %v119 = vunpack.c.l.b16 %v40
  %v120 = vunpack.c.l.b16 %v41
  %v121 = vunpack.c.l.b16 %v42
  %v122 = vunpack.c.l.b16 %v43
  %v123 = vunpack.c.l.b16 %v44
  %v124 = vunpack.c.l.b16 %v45
  %v125 = vunpack.c.l.b16 %v46
  %v126 = vunpack.c.l.b16 %v47
  %v127 = vunpack.c.l.b16 %v48
  %v128 = vunpack.c.l.b16 %v49
  %v129 = vpack.c.b16 %v98, %v97
  %v130 = vpack.c.b16 %v100, %v99
  %v131 = vpack.c.b16 %v102, %v101
  %v132 = vpack.c.b16 %v104, %v103
  %v133 = vpack.c.b16 %v106, %v105
  %v134 = vpack.c.b16 %v108, %v107
  %v135 = vpack.c.b16 %v110, %v109
  %v136 = vpack.c.b16 %v112, %v111
  %v137 = vpack.c.b16 %v114, %v113
  %v138 = vpack.c.b16 %v116, %v115
  %v139 = vpack.c.b16 %v118, %v117
  %v140 = vpack.c.b16 %v120, %v119
  %v141 = vpack.c.b16 %v122, %v121
  %v142 = vpack.c.b16 %v124, %v123
  %v143 = vpack.c.b16 %v126, %v125
  %v144 = vpack.c.b16 %v128, %v127
  %vm160 = vcmask 998400
  %v162 = vsel %vm160, %v60, 0
  %v165 = vsel %vm160, %v62, 0
  %vm167 = vcmask 1044480
  %v169 = vsel %vm167, %v144, 0
  %171 = vmatprep.subr.bf16.mxu0 0
  %172 = vmatpush1.bf16.msra.mxu0 %v129
  %173 = vmatprep.subr.bf16.mxu0 0
  %174 = vmatpush1.bf16.msra.mxu0 %v130
  %175 = vmatprep.subr.bf16.mxu0 0
  %176 = vmatpush1.bf16.msra.mxu0 %v131
  %177 = vmatprep.subr.bf16.mxu0 0
  %178 = vmatpush1.bf16.msra.mxu0 %v132
  %179 = vmatprep.subr.bf16.mxu0 0
  %180 = vmatpush1.bf16.msra.mxu0 %v133
  %181 = vmatprep.subr.bf16.mxu0 0
  %182 = vmatpush1.bf16.msra.mxu0 %v134
  %183 = vmatprep.subr.bf16.mxu0 0
  %184 = vmatpush1.bf16.msra.mxu0 %v135
  %185 = vmatprep.subr.bf16.mxu0 0
  %186 = vmatpush1.bf16.msra.mxu0 %v136
  %187 = vmatprep.subr.bf16.mxu0 0
  %188 = vmatpush1.bf16.msra.mxu0 %v137
  %189 = vmatprep.subr.bf16.mxu0 0
  %190 = vmatpush1.bf16.msra.mxu0 %v138
  %191 = vmatprep.subr.bf16.mxu0 0
  %192 = vmatpush1.bf16.msra.mxu0 %v139
  %193 = vmatprep.subr.bf16.mxu0 0
  %194 = vmatpush1.bf16.msra.mxu0 %v140
  %195 = vmatprep.subr.bf16.mxu0 0
  %196 = vmatpush1.bf16.msra.mxu0 %v141
  %197 = vmatprep.subr.bf16.mxu0 0
  %198 = vmatpush1.bf16.msra.mxu0 %v142
  %199 = vmatprep.subr.bf16.mxu0 0
  %200 = vmatpush1.bf16.msra.mxu0 %v143
  %201 = vmatprep.subr.bf16.mxu0 0
  %202 = vmatpush1.bf16.msra.mxu0 %v169
  %203 = vmatprep.mubr.bf16.mxu0 %v162
  %204 = vmatmul.mubr.bf16.gmra.mrb[0].mxu0 %v59
  %v205 = vpop.f32.mrb[0].mxu0
  %v206 = vadd.f32 0.0, %v205
  %v207 = vpop.f32.mrb[0].mxu0
  %v208 = vpop.f32.mrb[0].mxu0
  %v209 = vadd.f32 0.0, %v208
  %v210 = vpop.f32.mrb[0].mxu0
  %211 = vmatprep.mubr.bf16.mxu0 %v165
  %212 = vmatmul.mubr.bf16.gmra.mrb[0].mxu0 %v61
  %v213 = vpop.f32.mrb[0].mxu0
  %v214 = vadd.f32 0.0, %v213
  %v215 = vpop.f32.mrb[0].mxu0
  %v216 = vpop.f32.mrb[0].mxu0
  %v217 = vpop.f32.mrb[0].mxu0
  %218 = vdwg.mxu0
  %s219 = scalar_lea.vmem %s0, 128
  %v220 = vld [vmem:[%s219] sm:$0xf]
  %v221 = vld [vmem:[%s219 + $0x4] sm:$0xf]
  %v222 = vld [vmem:[%s219 + $0x8] sm:$0xf]
  %v223 = vld [vmem:[%s219 + $0xc] sm:$0xf]
  %v224 = vld [vmem:[%s219 + $0x10] sm:$0xf]
  %v225 = vld [vmem:[%s219 + $0x14] sm:$0xf]
  %v226 = vld [vmem:[%s219 + $0x18] sm:$0xf]
  %v227 = vld [vmem:[%s219 + $0x1c] sm:$0xf]
  %v228 = vld [vmem:[%s219 + $0x20] sm:$0xf]
  %v229 = vld [vmem:[%s219 + $0x24] sm:$0xf]
  %v230 = vld [vmem:[%s219 + $0x28] sm:$0xf]
  %v231 = vld [vmem:[%s219 + $0x2c] sm:$0xf]
  %v232 = vld [vmem:[%s219 + $0x30] sm:$0xf]
  %v233 = vld [vmem:[%s219 + $0x34] sm:$0xf]
  %v234 = vld [vmem:[%s219 + $0x38] sm:$0xf]
  %v235 = vld [vmem:[%s219 + $0x3c] sm:$0xf]
  %v236 = vld [vmem:[%s219 + $0x40] sm:$0xf]
  %v237 = vld [vmem:[%s219 + $0x44] sm:$0xf]
  %v238 = vld [vmem:[%s219 + $0x48] sm:$0xf]
  %v239 = vld [vmem:[%s219 + $0x4c] sm:$0xf]
  %v240 = vld [vmem:[%s219 + $0x50] sm:$0xf]
  %v241 = vld [vmem:[%s219 + $0x54] sm:$0xf]
  %v242 = vld [vmem:[%s219 + $0x58] sm:$0xf]
  %v243 = vld [vmem:[%s219 + $0x5c] sm:$0xf]
  %v244 = vld [vmem:[%s219 + $0x60] sm:$0xf]
  %v245 = vld [vmem:[%s219 + $0x64] sm:$0xf]
  %v246 = vld [vmem:[%s219 + $0x68] sm:$0xf]
  %v247 = vld [vmem:[%s219 + $0x6c] sm:$0xf]
  %v248 = vld [vmem:[%s219 + $0x70] sm:$0xf]
  %v249 = vld [vmem:[%s219 + $0x74] sm:$0xf]
  %v250 = vld [vmem:[%s219 + $0x78] sm:$0xf]
  %v251 = vld [vmem:[%s219 + $0x7c] sm:$0x1]
  %v284 = vunpack.c.l.b16 %v220
  %v285 = vunpack.c.l.b16 %v221
  %v286 = vunpack.c.l.b16 %v222
  %v287 = vunpack.c.l.b16 %v223
  %v288 = vunpack.c.l.b16 %v224
  %v289 = vunpack.c.l.b16 %v225
  %v290 = vunpack.c.l.b16 %v226
  %v291 = vunpack.c.l.b16 %v227
  %v292 = vunpack.c.l.b16 %v228
  %v293 = vunpack.c.l.b16 %v229
  %v294 = vunpack.c.l.b16 %v230
  %v295 = vunpack.c.l.b16 %v231
  %v296 = vunpack.c.l.b16 %v232
  %v297 = vunpack.c.l.b16 %v233
  %v298 = vunpack.c.l.b16 %v234
  %v299 = vunpack.c.l.b16 %v235
  %v300 = vunpack.c.l.b16 %v236
  %v301 = vunpack.c.l.b16 %v237
  %v302 = vunpack.c.l.b16 %v238
  %v303 = vunpack.c.l.b16 %v239
  %v304 = vunpack.c.l.b16 %v240
  %v305 = vunpack.c.l.b16 %v241
  %v306 = vunpack.c.l.b16 %v242
  %v307 = vunpack.c.l.b16 %v243
  %v308 = vunpack.c.l.b16 %v244
  %v309 = vunpack.c.l.b16 %v245
  %v310 = vunpack.c.l.b16 %v246
  %v311 = vunpack.c.l.b16 %v247
  %v312 = vunpack.c.l.b16 %v248
  %v313 = vunpack.c.l.b16 %v249
  %v314 = vunpack.c.l.b16 %v250
  %v315 = vunpack.c.l.b16 %v251
  %v316 = vpack.c.b16 %v285, %v284
  %v317 = vpack.c.b16 %v287, %v286
  %v318 = vpack.c.b16 %v289, %v288
  %v319 = vpack.c.b16 %v291, %v290
  %v320 = vpack.c.b16 %v293, %v292
  %v321 = vpack.c.b16 %v295, %v294
  %v322 = vpack.c.b16 %v297, %v296
  %v323 = vpack.c.b16 %v299, %v298
  %v324 = vpack.c.b16 %v301, %v300
  %v325 = vpack.c.b16 %v303, %v302
  %v326 = vpack.c.b16 %v305, %v304
  %v327 = vpack.c.b16 %v307, %v306
  %v328 = vpack.c.b16 %v309, %v308
  %v329 = vpack.c.b16 %v311, %v310
  %v330 = vpack.c.b16 %v313, %v312
  %v331 = vpack.c.b16 %v315, %v314
  %v348 = vsel %vm167, %v331, 0
  %350 = vmatprep.subr.bf16.mxu0 0
  %351 = vmatpush1.bf16.msra.mxu0 %v316
  %352 = vmatprep.subr.bf16.mxu0 0
  %353 = vmatpush1.bf16.msra.mxu0 %v317
  %354 = vmatprep.subr.bf16.mxu0 0
  %355 = vmatpush1.bf16.msra.mxu0 %v318
  %356 = vmatprep.subr.bf16.mxu0 0
  %357 = vmatpush1.bf16.msra.mxu0 %v319
  %358 = vmatprep.subr.bf16.mxu0 0
  %359 = vmatpush1.bf16.msra.mxu0 %v320
  %360 = vmatprep.subr.bf16.mxu0 0
  %361 = vmatpush1.bf16.msra.mxu0 %v321
  %362 = vmatprep.subr.bf16.mxu0 0
  %363 = vmatpush1.bf16.msra.mxu0 %v322
  %364 = vmatprep.subr.bf16.mxu0 0
  %365 = vmatpush1.bf16.msra.mxu0 %v323
  %366 = vmatprep.subr.bf16.mxu0 0
  %367 = vmatpush1.bf16.msra.mxu0 %v324
  %368 = vmatprep.subr.bf16.mxu0 0
  %369 = vmatpush1.bf16.msra.mxu0 %v325
  %370 = vmatprep.subr.bf16.mxu0 0
  %371 = vmatpush1.bf16.msra.mxu0 %v326
  %372 = vmatprep.subr.bf16.mxu0 0
  %373 = vmatpush1.bf16.msra.mxu0 %v327
  %374 = vmatprep.subr.bf16.mxu0 0
  %375 = vmatpush1.bf16.msra.mxu0 %v328
  %376 = vmatprep.subr.bf16.mxu0 0
  %377 = vmatpush1.bf16.msra.mxu0 %v329
  %378 = vmatprep.subr.bf16.mxu0 0
  %379 = vmatpush1.bf16.msra.mxu0 %v330
  %380 = vmatprep.subr.bf16.mxu0 0
  %381 = vmatpush1.bf16.msra.mxu0 %v348
  %382 = vmatprep.mubr.bf16.mxu0 %v162
  %383 = vmatmul.mubr.bf16.gmra.mrb[0].mxu0 %v59
  %v384 = vpop.f32.mrb[0].mxu0
  %v385 = vadd.f32 0.0, %v384
  %v386 = vpop.f32.mrb[0].mxu0
  %v387 = vpop.f32.mrb[0].mxu0
  %v388 = vadd.f32 0.0, %v387
  %v389 = vpop.f32.mrb[0].mxu0
  %390 = vmatprep.mubr.bf16.mxu0 %v165
  %391 = vmatmul.mubr.bf16.gmra.mrb[0].mxu0 %v61
  %v392 = vpop.f32.mrb[0].mxu0
  %v393 = vadd.f32 0.0, %v392
  %v394 = vpop.f32.mrb[0].mxu0
  %v395 = vpop.f32.mrb[0].mxu0
  %v396 = vpop.f32.mrb[0].mxu0
  %397 = vdwg.mxu0
  %v398 = vmax.f32 %v206, %v385
  %v399 = vmax.f32 %v209, %v388
  %v400 = vmax.f32 %v214, %v393
  %s401 = scalar_lea.vmem %s0, 256
  %v402 = vld [vmem:[%s401] sm:$0xf]
  %v403 = vld [vmem:[%s401 + $0x4] sm:$0xf]
  %v404 = vld [vmem:[%s401 + $0x8] sm:$0xf]
  %v405 = vld [vmem:[%s401 + $0xc] sm:$0xf]
  %v406 = vld [vmem:[%s401 + $0x10] sm:$0xf]
  %v407 = vld [vmem:[%s401 + $0x14] sm:$0xf]
  %v408 = vld [vmem:[%s401 + $0x18] sm:$0xf]
  %v409 = vld [vmem:[%s401 + $0x1c] sm:$0xf]
  %v410 = vld [vmem:[%s401 + $0x20] sm:$0xf]
  %v411 = vld [vmem:[%s401 + $0x24] sm:$0xf]
  %v412 = vld [vmem:[%s401 + $0x28] sm:$0xf]
  %v413 = vld [vmem:[%s401 + $0x2c] sm:$0xf]
  %v414 = vld [vmem:[%s401 + $0x30] sm:$0xf]
  %v415 = vld [vmem:[%s401 + $0x34] sm:$0xf]
  %v416 = vld [vmem:[%s401 + $0x38] sm:$0xf]
  %v417 = vld [vmem:[%s401 + $0x3c] sm:$0xf]
  %v418 = vld [vmem:[%s401 + $0x40] sm:$0xf]
  %v419 = vld [vmem:[%s401 + $0x44] sm:$0xf]
  %v420 = vld [vmem:[%s401 + $0x48] sm:$0xf]
  %v421 = vld [vmem:[%s401 + $0x4c] sm:$0xf]
  %v422 = vld [vmem:[%s401 + $0x50] sm:$0xf]
  %v423 = vld [vmem:[%s401 + $0x54] sm:$0xf]
  %v424 = vld [vmem:[%s401 + $0x58] sm:$0xf]
  %v425 = vld [vmem:[%s401 + $0x5c] sm:$0xf]
  %v426 = vld [vmem:[%s401 + $0x60] sm:$0xf]
  %v427 = vld [vmem:[%s401 + $0x64] sm:$0xf]
  %v428 = vld [vmem:[%s401 + $0x68] sm:$0xf]
  %v429 = vld [vmem:[%s401 + $0x6c] sm:$0xf]
  %v430 = vld [vmem:[%s401 + $0x70] sm:$0xf]
  %v431 = vld [vmem:[%s401 + $0x74] sm:$0xf]
  %v432 = vld [vmem:[%s401 + $0x78] sm:$0xf]
  %v433 = vld [vmem:[%s401 + $0x7c] sm:$0x1]
  %v466 = vunpack.c.l.b16 %v402
  %v467 = vunpack.c.l.b16 %v403
  %v468 = vunpack.c.l.b16 %v404
  %v469 = vunpack.c.l.b16 %v405
  %v470 = vunpack.c.l.b16 %v406
  %v471 = vunpack.c.l.b16 %v407
  %v472 = vunpack.c.l.b16 %v408
  %v473 = vunpack.c.l.b16 %v409
  %v474 = vunpack.c.l.b16 %v410
  %v475 = vunpack.c.l.b16 %v411
  %v476 = vunpack.c.l.b16 %v412
  %v477 = vunpack.c.l.b16 %v413
  %v478 = vunpack.c.l.b16 %v414
  %v479 = vunpack.c.l.b16 %v415
  %v480 = vunpack.c.l.b16 %v416
  %v481 = vunpack.c.l.b16 %v417
  %v482 = vunpack.c.l.b16 %v418
  %v483 = vunpack.c.l.b16 %v419
  %v484 = vunpack.c.l.b16 %v420
  %v485 = vunpack.c.l.b16 %v421
  %v486 = vunpack.c.l.b16 %v422
  %v487 = vunpack.c.l.b16 %v423
  %v488 = vunpack.c.l.b16 %v424
  %v489 = vunpack.c.l.b16 %v425
  %v490 = vunpack.c.l.b16 %v426
  %v491 = vunpack.c.l.b16 %v427
  %v492 = vunpack.c.l.b16 %v428
  %v493 = vunpack.c.l.b16 %v429
  %v494 = vunpack.c.l.b16 %v430
  %v495 = vunpack.c.l.b16 %v431
  %v496 = vunpack.c.l.b16 %v432
  %v497 = vunpack.c.l.b16 %v433
  %v498 = vpack.c.b16 %v467, %v466
  %v499 = vpack.c.b16 %v469, %v468
  %v500 = vpack.c.b16 %v471, %v470
  %v501 = vpack.c.b16 %v473, %v472
  %v502 = vpack.c.b16 %v475, %v474
  %v503 = vpack.c.b16 %v477, %v476
  %v504 = vpack.c.b16 %v479, %v478
  %v505 = vpack.c.b16 %v481, %v480
  %v506 = vpack.c.b16 %v483, %v482
  %v507 = vpack.c.b16 %v485, %v484
  %v508 = vpack.c.b16 %v487, %v486
  %v509 = vpack.c.b16 %v489, %v488
  %v510 = vpack.c.b16 %v491, %v490
  %v511 = vpack.c.b16 %v493, %v492
  %v512 = vpack.c.b16 %v495, %v494
  %v513 = vpack.c.b16 %v497, %v496
  %v530 = vsel %vm167, %v513, 0
  %532 = vmatprep.subr.bf16.mxu0 0
  %533 = vmatpush1.bf16.msra.mxu0 %v498
  %534 = vmatprep.subr.bf16.mxu0 0
  %535 = vmatpush1.bf16.msra.mxu0 %v499
  %536 = vmatprep.subr.bf16.mxu0 0
  %537 = vmatpush1.bf16.msra.mxu0 %v500
  %538 = vmatprep.subr.bf16.mxu0 0
  %539 = vmatpush1.bf16.msra.mxu0 %v501
  %540 = vmatprep.subr.bf16.mxu0 0
  %541 = vmatpush1.bf16.msra.mxu0 %v502
  %542 = vmatprep.subr.bf16.mxu0 0
  %543 = vmatpush1.bf16.msra.mxu0 %v503
  %544 = vmatprep.subr.bf16.mxu0 0
  %545 = vmatpush1.bf16.msra.mxu0 %v504
  %546 = vmatprep.subr.bf16.mxu0 0
  %547 = vmatpush1.bf16.msra.mxu0 %v505
  %548 = vmatprep.subr.bf16.mxu0 0
  %549 = vmatpush1.bf16.msra.mxu0 %v506
  %550 = vmatprep.subr.bf16.mxu0 0
  %551 = vmatpush1.bf16.msra.mxu0 %v507
  %552 = vmatprep.subr.bf16.mxu0 0
  %553 = vmatpush1.bf16.msra.mxu0 %v508
  %554 = vmatprep.subr.bf16.mxu0 0
  %555 = vmatpush1.bf16.msra.mxu0 %v509
  %556 = vmatprep.subr.bf16.mxu0 0
  %557 = vmatpush1.bf16.msra.mxu0 %v510
  %558 = vmatprep.subr.bf16.mxu0 0
  %559 = vmatpush1.bf16.msra.mxu0 %v511
  %560 = vmatprep.subr.bf16.mxu0 0
  %561 = vmatpush1.bf16.msra.mxu0 %v512
  %562 = vmatprep.subr.bf16.mxu0 0
  %563 = vmatpush1.bf16.msra.mxu0 %v530
  %564 = vmatprep.mubr.bf16.mxu0 %v162
  %565 = vmatmul.mubr.bf16.gmra.mrb[0].mxu0 %v59
  %v566 = vpop.f32.mrb[0].mxu0
  %v567 = vadd.f32 0.0, %v566
  %v568 = vpop.f32.mrb[0].mxu0
  %v569 = vpop.f32.mrb[0].mxu0
  %v570 = vadd.f32 0.0, %v569
  %v571 = vpop.f32.mrb[0].mxu0
  %572 = vmatprep.mubr.bf16.mxu0 %v165
  %573 = vmatmul.mubr.bf16.gmra.mrb[0].mxu0 %v61
  %v574 = vpop.f32.mrb[0].mxu0
  %v575 = vadd.f32 0.0, %v574
  %v576 = vpop.f32.mrb[0].mxu0
  %v577 = vpop.f32.mrb[0].mxu0
  %v578 = vpop.f32.mrb[0].mxu0
  %579 = vdwg.mxu0
  %v580 = vmax.f32 %v398, %v567
  %v581 = vmax.f32 %v399, %v570
  %v582 = vmax.f32 %v400, %v575
  %s583 = scalar_lea.vmem %s0, 384
  %v584 = vld [vmem:[%s583] sm:$0xf]
  %v585 = vld [vmem:[%s583 + $0x4] sm:$0xf]
  %v586 = vld [vmem:[%s583 + $0x8] sm:$0xf]
  %v587 = vld [vmem:[%s583 + $0xc] sm:$0xf]
  %v588 = vld [vmem:[%s583 + $0x10] sm:$0xf]
  %v589 = vld [vmem:[%s583 + $0x14] sm:$0xf]
  %v590 = vld [vmem:[%s583 + $0x18] sm:$0xf]
  %v591 = vld [vmem:[%s583 + $0x1c] sm:$0xf]
  %v592 = vld [vmem:[%s583 + $0x20] sm:$0xf]
  %v593 = vld [vmem:[%s583 + $0x24] sm:$0xf]
  %v594 = vld [vmem:[%s583 + $0x28] sm:$0xf]
  %v595 = vld [vmem:[%s583 + $0x2c] sm:$0xf]
  %v596 = vld [vmem:[%s583 + $0x30] sm:$0xf]
  %v597 = vld [vmem:[%s583 + $0x34] sm:$0xf]
  %v598 = vld [vmem:[%s583 + $0x38] sm:$0xf]
  %v599 = vld [vmem:[%s583 + $0x3c] sm:$0xf]
  %v600 = vld [vmem:[%s583 + $0x40] sm:$0xf]
  %v601 = vld [vmem:[%s583 + $0x44] sm:$0xf]
  %v602 = vld [vmem:[%s583 + $0x48] sm:$0xf]
  %v603 = vld [vmem:[%s583 + $0x4c] sm:$0xf]
  %v604 = vld [vmem:[%s583 + $0x50] sm:$0xf]
  %v605 = vld [vmem:[%s583 + $0x54] sm:$0xf]
  %v606 = vld [vmem:[%s583 + $0x58] sm:$0xf]
  %v607 = vld [vmem:[%s583 + $0x5c] sm:$0xf]
  %v608 = vld [vmem:[%s583 + $0x60] sm:$0xf]
  %v609 = vld [vmem:[%s583 + $0x64] sm:$0xf]
  %v610 = vld [vmem:[%s583 + $0x68] sm:$0xf]
  %v611 = vld [vmem:[%s583 + $0x6c] sm:$0xf]
  %v612 = vld [vmem:[%s583 + $0x70] sm:$0xf]
  %v613 = vld [vmem:[%s583 + $0x74] sm:$0xf]
  %v614 = vld [vmem:[%s583 + $0x78] sm:$0xf]
  %v615 = vld [vmem:[%s583 + $0x7c] sm:$0x1]
  %v648 = vunpack.c.l.b16 %v584
  %v649 = vunpack.c.l.b16 %v585
  %v650 = vunpack.c.l.b16 %v586
  %v651 = vunpack.c.l.b16 %v587
  %v652 = vunpack.c.l.b16 %v588
  %v653 = vunpack.c.l.b16 %v589
  %v654 = vunpack.c.l.b16 %v590
  %v655 = vunpack.c.l.b16 %v591
  %v656 = vunpack.c.l.b16 %v592
  %v657 = vunpack.c.l.b16 %v593
  %v658 = vunpack.c.l.b16 %v594
  %v659 = vunpack.c.l.b16 %v595
  %v660 = vunpack.c.l.b16 %v596
  %v661 = vunpack.c.l.b16 %v597
  %v662 = vunpack.c.l.b16 %v598
  %v663 = vunpack.c.l.b16 %v599
  %v664 = vunpack.c.l.b16 %v600
  %v665 = vunpack.c.l.b16 %v601
  %v666 = vunpack.c.l.b16 %v602
  %v667 = vunpack.c.l.b16 %v603
  %v668 = vunpack.c.l.b16 %v604
  %v669 = vunpack.c.l.b16 %v605
  %v670 = vunpack.c.l.b16 %v606
  %v671 = vunpack.c.l.b16 %v607
  %v672 = vunpack.c.l.b16 %v608
  %v673 = vunpack.c.l.b16 %v609
  %v674 = vunpack.c.l.b16 %v610
  %v675 = vunpack.c.l.b16 %v611
  %v676 = vunpack.c.l.b16 %v612
  %v677 = vunpack.c.l.b16 %v613
  %v678 = vunpack.c.l.b16 %v614
  %v679 = vunpack.c.l.b16 %v615
  %v680 = vpack.c.b16 %v649, %v648
  %v681 = vpack.c.b16 %v651, %v650
  %v682 = vpack.c.b16 %v653, %v652
  %v683 = vpack.c.b16 %v655, %v654
  %v684 = vpack.c.b16 %v657, %v656
  %v685 = vpack.c.b16 %v659, %v658
  %v686 = vpack.c.b16 %v661, %v660
  %v687 = vpack.c.b16 %v663, %v662
  %v688 = vpack.c.b16 %v665, %v664
  %v689 = vpack.c.b16 %v667, %v666
  %v690 = vpack.c.b16 %v669, %v668
  %v691 = vpack.c.b16 %v671, %v670
  %v692 = vpack.c.b16 %v673, %v672
  %v693 = vpack.c.b16 %v675, %v674
  %v694 = vpack.c.b16 %v677, %v676
  %v695 = vpack.c.b16 %v679, %v678
  %v712 = vsel %vm167, %v695, 0
  %714 = vmatprep.subr.bf16.mxu0 0
  %715 = vmatpush1.bf16.msra.mxu0 %v680
  %716 = vmatprep.subr.bf16.mxu0 0
  %717 = vmatpush1.bf16.msra.mxu0 %v681
  %718 = vmatprep.subr.bf16.mxu0 0
  %719 = vmatpush1.bf16.msra.mxu0 %v682
  %720 = vmatprep.subr.bf16.mxu0 0
  %721 = vmatpush1.bf16.msra.mxu0 %v683
  %722 = vmatprep.subr.bf16.mxu0 0
  %723 = vmatpush1.bf16.msra.mxu0 %v684
  %724 = vmatprep.subr.bf16.mxu0 0
  %725 = vmatpush1.bf16.msra.mxu0 %v685
  %726 = vmatprep.subr.bf16.mxu0 0
  %727 = vmatpush1.bf16.msra.mxu0 %v686
  %728 = vmatprep.subr.bf16.mxu0 0
  %729 = vmatpush1.bf16.msra.mxu0 %v687
  %730 = vmatprep.subr.bf16.mxu0 0
  %731 = vmatpush1.bf16.msra.mxu0 %v688
  %732 = vmatprep.subr.bf16.mxu0 0
  %733 = vmatpush1.bf16.msra.mxu0 %v689
  %734 = vmatprep.subr.bf16.mxu0 0
  %735 = vmatpush1.bf16.msra.mxu0 %v690
  %736 = vmatprep.subr.bf16.mxu0 0
  %737 = vmatpush1.bf16.msra.mxu0 %v691
  %738 = vmatprep.subr.bf16.mxu0 0
  %739 = vmatpush1.bf16.msra.mxu0 %v692
  %740 = vmatprep.subr.bf16.mxu0 0
  %741 = vmatpush1.bf16.msra.mxu0 %v693
  %742 = vmatprep.subr.bf16.mxu0 0
  %743 = vmatpush1.bf16.msra.mxu0 %v694
  %744 = vmatprep.subr.bf16.mxu0 0
  %745 = vmatpush1.bf16.msra.mxu0 %v712
  %746 = vmatprep.mubr.bf16.mxu0 %v162
  %747 = vmatmul.mubr.bf16.gmra.mrb[0].mxu0 %v59
  %v748 = vpop.f32.mrb[0].mxu0
  %v749 = vadd.f32 0.0, %v748
  %v750 = vpop.f32.mrb[0].mxu0
  %v751 = vpop.f32.mrb[0].mxu0
  %v752 = vadd.f32 0.0, %v751
  %v753 = vpop.f32.mrb[0].mxu0
  %754 = vmatprep.mubr.bf16.mxu0 %v165
  %755 = vmatmul.mubr.bf16.gmra.mrb[0].mxu0 %v61
  %v756 = vpop.f32.mrb[0].mxu0
  %v757 = vadd.f32 0.0, %v756
  %v758 = vpop.f32.mrb[0].mxu0
  %v759 = vpop.f32.mrb[0].mxu0
  %v760 = vpop.f32.mrb[0].mxu0
  %761 = vdwg.mxu0
  %v762 = vmax.f32 %v580, %v749
  %v763 = vmax.f32 %v581, %v752
  %v764 = vmax.f32 %v582, %v757
  %v765 = vld [vmem:[%s2] sm:$0xff]
  %v766 = vld [vmem:[%s2 + $0x8] sm:$0xff]
  %v767 = vld [vmem:[%s2 + $0x10] sm:$0xf]
  %769 = vset.pattern.permute.xlu0 0
  %770 = vperm.xlu0 %769, %v765
  %v771 = vpop.permute.xlu0 %770
  %774 = vset.pattern.permute.xlu0 0
  %775 = vperm.xlu0 %774, %v766
  %v776 = vpop.permute.xlu0 %775
  %779 = vset.pattern.permute.xlu0 0
  %780 = vperm.xlu0 %779, %v767
  %v781 = vpop.permute.xlu0 %780
  %v783 = vadd.f32 %v762, %v771
  %v784 = vadd.f32 %v763, %v776
  %v785 = vadd.f32 %v764, %v781
  %v786 = vmax.f32 %v783, 0.0
  %v787 = vmax.f32 %v784, 0.0
  %v788 = vmax.f32 %v785, 0.0
  %v789 = vpack.c.bf16 %v787, %v786
  %v790 = vpack.c.bf16 %v788, %v788
  %v793 = vunpack.c.l.b16 %v789
  %v794 = vunpack.c.h.b16 %v789
  %v795 = vunpack.c.l.b16 %v790
  %v796 = vpack.c.b16 %v793, %v793
  %v797 = vpack.c.b16 %v794, %v794
  %v798 = vpack.c.b16 %v795, %v795
  %802 = vst [vmem:[%s3] sm:$0xf] %v796
  %803 = vst [vmem:[%s3 + $0x4] sm:$0xf] %v797
  %804 = vst [vmem:[%s3 + $0x8] sm:$0x3] %v798
  // Predicated region
  $region14: #{net_forward.4} parent=0 // pred_check
    _
  $region15: #{net_forward.4} parent=0 // pred_check_branch
    %806 = sbr.rel (0) target = $region17
  $region16: #{net_forward.4} parent=0 // pred_region
    _
  $region17: #{net_forward.4} parent=0 // pred_fallthru
    _
  // Predicated region
  $region18: #{net_forward.4} parent=0 // pred_check
    _
  $region19: #{net_forward.4} parent=0 // pred_check_branch
    %808 = sbr.rel (0) target = $region21
  $region20: #{net_forward.4} parent=0 // pred_region
    _
  $region21: #{net_forward.4} parent=0 // pred_fallthru
    _

// kernel: net_forward.5
$region0: #{net_forward.5}
  #allocation0 [shape = 'u32[]', space=smem, size = 0x4, offset = 0x4, fixed_abs, tag = 'smem constant byte address 0x4 - core index']
  #allocation1 [shape = 'u32[144,128]{1,0:T(1,128)}', space=vmem, size = 0x12000, scoped, tag = 'internal scratch']
  #allocation2 [shape = 'bf16[50,128]{1,0:T(8,128)(2,1)}', space=vmem, size = 0x3800, scoped, tag = 'scratch operand']
  %s0 = inlined_call_operand.vmem [shape: bf16[320,128], index: 0, kind: input, shape index: {}]
  %s1 = inlined_call_operand.vmem [shape: bf16[50,320], index: 1, kind: input, shape index: {}]
  %s2 = inlined_call_operand.vmem [shape: f32[50,1], index: 2, kind: input, shape index: {}]
  %s3 = inlined_call_operand.vmem [shape: bf16[10,50], index: 3, kind: input, shape index: {}]
  %s4 = inlined_call_operand.vmem [shape: f32[10,1], index: 4, kind: input, shape index: {}]
  %s5 = inlined_call_operand.vmem [shape: f32[10,128], index: 5, kind: output, shape index: {}]
  %s6 = sld [smem:[#allocation0]]
  $region30: #{net_forward.5} parent=0
    _
  %s8 = ssub.s32 1, %s6
  %s9 = scalar_select 0, %s8, %s6
  // Predicated region
  $region2: #{net_forward.5} parent=0 // pred_check
    _
  $region3: #{net_forward.5} parent=0 // pred_check_branch
    %11 = sbr.rel (0) target = $region5
  $region4: #{net_forward.5} parent=0 // pred_region
    _
  $region5: #{net_forward.5} parent=0 // pred_fallthru
    _
  // Predicated region
  $region6: #{net_forward.5} parent=0 // pred_check
    _
  $region7: #{net_forward.5} parent=0 // pred_check_branch
    %13 = sbr.rel (0) target = $region9
  $region8: #{net_forward.5} parent=0 // pred_region
    _
  $region9: #{net_forward.5} parent=0 // pred_fallthru
    _
  // Predicated region
  $region10: #{net_forward.5} parent=0 // pred_check
    _
  $region11: #{net_forward.5} parent=0 // pred_check_branch
    %15 = sbr.rel (0) target = $region13
  $region12: #{net_forward.5} parent=0 // pred_region
    _
  $region13: #{net_forward.5} parent=0 // pred_fallthru
    _
  // Predicated region
  $region14: #{net_forward.5} parent=0 // pred_check
    _
  $region15: #{net_forward.5} parent=0 // pred_check_branch
    %17 = sbr.rel (0) target = $region17
  $region16: #{net_forward.5} parent=0 // pred_region
    _
  $region17: #{net_forward.5} parent=0 // pred_fallthru
    _
  // Predicated region
  $region18: #{net_forward.5} parent=0 // pred_check
    _
  $region19: #{net_forward.5} parent=0 // pred_check_branch
    %19 = sbr.rel (0) target = $region21
  $region20: #{net_forward.5} parent=0 // pred_region
    _
  $region21: #{net_forward.5} parent=0 // pred_fallthru
    _
  %v21 = vld [vmem:[%s1] sm:$0xff]
  %v22 = vld [vmem:[%s1 + $0x8] sm:$0xf]
  %v23 = vld [vmem:[%s1 + $0xc] sm:$0xff]
  %v24 = vld [vmem:[%s1 + $0x14] sm:$0xf]
  %v25 = vld [vmem:[%s1 + $0x18] sm:$0xff]
  %v26 = vld [vmem:[%s1 + $0x20] sm:$0xf]
  %v27 = vld [vmem:[%s1 + $0x24] sm:$0xff]
  %v28 = vld [vmem:[%s1 + $0x2c] sm:$0xf]
  %v29 = vld [vmem:[%s1 + $0x30] sm:$0xff]
  %v30 = vld [vmem:[%s1 + $0x38] sm:$0xf]
  %v31 = vld [vmem:[%s1 + $0x3c] sm:$0xff]
  %v32 = vld [vmem:[%s1 + $0x44] sm:$0xf]
  %v33 = vld [vmem:[%s1 + $0x48] sm:$0x11]
  %v34 = vld [vmem:[%s1 + $0x50] sm:$0x1]
  %v35 = vld [vmem:[%s0] sm:$0xf]
  %v36 = vld [vmem:[%s0 + $0x4] sm:$0xf]
  %v37 = vld [vmem:[%s0 + $0x8] sm:$0xf]
  %v38 = vld [vmem:[%s0 + $0xc] sm:$0xf]
  %v39 = vld [vmem:[%s0 + $0x10] sm:$0xf]
  %v40 = vld [vmem:[%s0 + $0x14] sm:$0xf]
  %v41 = vld [vmem:[%s0 + $0x18] sm:$0xf]
  %v42 = vld [vmem:[%s0 + $0x1c] sm:$0xf]
  %v43 = vld [vmem:[%s0 + $0x20] sm:$0xf]
  %v44 = vld [vmem:[%s0 + $0x24] sm:$0xf]
  %v45 = vld [vmem:[%s0 + $0x28] sm:$0xf]
  %v46 = vld [vmem:[%s0 + $0x2c] sm:$0xf]
  %v47 = vld [vmem:[%s0 + $0x30] sm:$0xf]
  %v48 = vld [vmem:[%s0 + $0x34] sm:$0xf]
  %v49 = vld [vmem:[%s0 + $0x38] sm:$0xf]
  %v50 = vld [vmem:[%s0 + $0x3c] sm:$0xf]
  %v51 = vld [vmem:[%s0 + $0x40] sm:$0xf]
  %v52 = vld [vmem:[%s0 + $0x44] sm:$0xf]
  %v53 = vld [vmem:[%s0 + $0x48] sm:$0xf]
  %v54 = vld [vmem:[%s0 + $0x4c] sm:$0xf]
  %v55 = vld [vmem:[%s0 + $0x50] sm:$0xf]
  %v56 = vld [vmem:[%s0 + $0x54] sm:$0xf]
  %v57 = vld [vmem:[%s0 + $0x58] sm:$0xf]
  %v58 = vld [vmem:[%s0 + $0x5c] sm:$0xf]
  %v59 = vld [vmem:[%s0 + $0x60] sm:$0xf]
  %v60 = vld [vmem:[%s0 + $0x64] sm:$0xf]
  %v61 = vld [vmem:[%s0 + $0x68] sm:$0xf]
  %v62 = vld [vmem:[%s0 + $0x6c] sm:$0xf]
  %v63 = vld [vmem:[%s0 + $0x70] sm:$0xf]
  %v64 = vld [vmem:[%s0 + $0x74] sm:$0xf]
  %v65 = vld [vmem:[%s0 + $0x78] sm:$0xf]
  %v66 = vld [vmem:[%s0 + $0x7c] sm:$0xf]
  %v67 = vld [vmem:[%s0 + $0x80] sm:$0xf]
  %v68 = vld [vmem:[%s0 + $0x84] sm:$0xf]
  %v69 = vld [vmem:[%s0 + $0x88] sm:$0xf]
  %v70 = vld [vmem:[%s0 + $0x8c] sm:$0xf]
  %v71 = vld [vmem:[%s0 + $0x90] sm:$0xf]
  %v72 = vld [vmem:[%s0 + $0x94] sm:$0xf]
  %v73 = vld [vmem:[%s0 + $0x98] sm:$0xf]
  %v74 = vld [vmem:[%s0 + $0x9c] sm:$0xf]
  %v75 = vld [vmem:[%s2] sm:$0xff]
  %v76 = vld [vmem:[%s2 + $0x8] sm:$0xff]
  %v77 = vld [vmem:[%s2 + $0x10] sm:$0xff]
  %v78 = vld [vmem:[%s2 + $0x18] sm:$0xff]
  %v79 = vld [vmem:[%s2 + $0x20] sm:$0xff]
  %v80 = vld [vmem:[%s2 + $0x28] sm:$0xff]
  %v81 = vld [vmem:[%s2 + $0x30] sm:$0x3]
  %83 = vset.pattern.permute.xlu0 0
  %84 = vperm.xlu0 %83, %v75
  %v85 = vpop.permute.xlu0 %84
  %88 = vset.pattern.permute.xlu0 0
  %89 = vperm.xlu0 %88, %v76
  %v90 = vpop.permute.xlu0 %89
  %93 = vset.pattern.permute.xlu0 0
  %94 = vperm.xlu0 %93, %v77
  %v95 = vpop.permute.xlu0 %94
  %98 = vset.pattern.permute.xlu0 0
  %99 = vperm.xlu0 %98, %v78
  %v100 = vpop.permute.xlu0 %99
  %103 = vset.pattern.permute.xlu0 0
  %104 = vperm.xlu0 %103, %v79
  %v105 = vpop.permute.xlu0 %104
  %108 = vset.pattern.permute.xlu0 0
  %109 = vperm.xlu0 %108, %v80
  %v110 = vpop.permute.xlu0 %109
  %113 = vset.pattern.permute.xlu0 0
  %114 = vperm.xlu0 %113, %v81
  %v115 = vpop.permute.xlu0 %114
  %v131 = vunpack.c.l.b16 %v21
  %v132 = vunpack.c.h.b16 %v21
  %v133 = vunpack.c.l.b16 %v22
  %v134 = vunpack.c.l.b16 %v23
  %v135 = vunpack.c.h.b16 %v23
  %v136 = vunpack.c.l.b16 %v24
  %v137 = vunpack.c.l.b16 %v25
  %v138 = vunpack.c.h.b16 %v25
  %v139 = vunpack.c.l.b16 %v26
  %v140 = vunpack.c.l.b16 %v27
  %v141 = vunpack.c.h.b16 %v27
  %v142 = vunpack.c.l.b16 %v28
  %v143 = vunpack.c.l.b16 %v29
  %v144 = vunpack.c.h.b16 %v29
  %v145 = vunpack.c.l.b16 %v30
  %v146 = vunpack.c.l.b16 %v31
  %v147 = vunpack.c.h.b16 %v31
  %v148 = vunpack.c.l.b16 %v32
  %v149 = vunpack.c.l.b16 %v33
  %v150 = vunpack.c.h.b16 %v33
  %v151 = vunpack.c.l.b16 %v34
  %v152 = vpack.c.b16 %v134, %v131
  %v153 = vpack.c.b16 %v135, %v132
  %v154 = vpack.c.b16 %v136, %v133
  %v155 = vpack.c.b16 %v140, %v137
  %v156 = vpack.c.b16 %v141, %v138
  %v157 = vpack.c.b16 %v142, %v139
  %v158 = vpack.c.b16 %v146, %v143
  %v159 = vpack.c.b16 %v147, %v144
  %v160 = vpack.c.b16 %v148, %v145
  %v161 = vpack.c.b16 %v149, %v149
  %v162 = vpack.c.b16 %v150, %v150
  %v163 = vpack.c.b16 %v151, %v151
  %v212 = vunpack.c.l.b16 %v35
  %v213 = vunpack.c.l.b16 %v36
  %v214 = vunpack.c.l.b16 %v37
  %v215 = vunpack.c.l.b16 %v38
  %v216 = vunpack.c.l.b16 %v39
  %v217 = vunpack.c.l.b16 %v40
  %v218 = vunpack.c.l.b16 %v41
  %v219 = vunpack.c.l.b16 %v42
  %v220 = vunpack.c.l.b16 %v43
  %v221 = vunpack.c.l.b16 %v44
  %v222 = vunpack.c.l.b16 %v45
  %v223 = vunpack.c.l.b16 %v46
  %v224 = vunpack.c.l.b16 %v47
  %v225 = vunpack.c.l.b16 %v48
  %v226 = vunpack.c.l.b16 %v49
  %v227 = vunpack.c.l.b16 %v50
  %v228 = vunpack.c.l.b16 %v51
  %v229 = vunpack.c.l.b16 %v52
  %v230 = vunpack.c.l.b16 %v53
  %v231 = vunpack.c.l.b16 %v54
  %v232 = vunpack.c.l.b16 %v55
  %v233 = vunpack.c.l.b16 %v56
  %v234 = vunpack.c.l.b16 %v57
  %v235 = vunpack.c.l.b16 %v58
  %v236 = vunpack.c.l.b16 %v59
  %v237 = vunpack.c.l.b16 %v60
  %v238 = vunpack.c.l.b16 %v61
  %v239 = vunpack.c.l.b16 %v62
  %v240 = vunpack.c.l.b16 %v63
  %v241 = vunpack.c.l.b16 %v64
  %v242 = vunpack.c.l.b16 %v65
  %v243 = vunpack.c.l.b16 %v66
  %v244 = vunpack.c.l.b16 %v67
  %v245 = vunpack.c.l.b16 %v68
  %v246 = vunpack.c.l.b16 %v69
  %v247 = vunpack.c.l.b16 %v70
  %v248 = vunpack.c.l.b16 %v71
  %v249 = vunpack.c.l.b16 %v72
  %v250 = vunpack.c.l.b16 %v73
  %v251 = vunpack.c.l.b16 %v74
  %v252 = vpack.c.b16 %v213, %v212
  %v253 = vpack.c.b16 %v215, %v214
  %v254 = vpack.c.b16 %v217, %v216
  %v255 = vpack.c.b16 %v219, %v218
  %v256 = vpack.c.b16 %v221, %v220
  %v257 = vpack.c.b16 %v223, %v222
  %v258 = vpack.c.b16 %v225, %v224
  %v259 = vpack.c.b16 %v227, %v226
  %v260 = vpack.c.b16 %v229, %v228
  %v261 = vpack.c.b16 %v231, %v230
  %v262 = vpack.c.b16 %v233, %v232
  %v263 = vpack.c.b16 %v235, %v234
  %v264 = vpack.c.b16 %v237, %v236
  %v265 = vpack.c.b16 %v239, %v238
  %v266 = vpack.c.b16 %v241, %v240
  %v267 = vpack.c.b16 %v243, %v242
  %v268 = vpack.c.b16 %v245, %v244
  %v269 = vpack.c.b16 %v247, %v246
  %v270 = vpack.c.b16 %v249, %v248
  %v271 = vpack.c.b16 %v251, %v250
  %vm292 = vcmask 523264
  %v294 = vsel %vm292, %v154, 0
  %v297 = vsel %vm292, %v157, 0
  %v300 = vsel %vm292, %v160, 0
  %v303 = vsel %vm292, %v163, 0
  %305 = vmatprep.subr.bf16.mxu0 0
  %306 = vmatpush1.bf16.msra.mxu0 %v252
  %307 = vmatprep.subr.bf16.mxu0 0
  %308 = vmatpush1.bf16.msra.mxu0 %v253
  %309 = vmatprep.subr.bf16.mxu0 0
  %310 = vmatpush1.bf16.msra.mxu0 %v254
  %311 = vmatprep.subr.bf16.mxu0 0
  %312 = vmatpush1.bf16.msra.mxu0 %v255
  %313 = vmatprep.subr.bf16.mxu0 0
  %314 = vmatpush1.bf16.msra.mxu0 %v256
  %315 = vmatprep.subr.bf16.mxu0 0
  %316 = vmatpush1.bf16.msra.mxu0 %v257
  %317 = vmatprep.subr.bf16.mxu0 0
  %318 = vmatpush1.bf16.msra.mxu0 %v258
  %319 = vmatprep.subr.bf16.mxu0 0
  %320 = vmatpush1.bf16.msra.mxu0 %v259
  %321 = vmatprep.subr.bf16.mxu0 0
  %322 = vmatpush1.bf16.msra.mxu0 %v260
  %323 = vmatprep.subr.bf16.mxu0 0
  %324 = vmatpush1.bf16.msra.mxu0 %v261
  %325 = vmatprep.subr.bf16.mxu0 0
  %326 = vmatpush1.bf16.msra.mxu0 %v262
  %327 = vmatprep.subr.bf16.mxu0 0
  %328 = vmatpush1.bf16.msra.mxu0 %v263
  %329 = vmatprep.subr.bf16.mxu0 0
  %330 = vmatpush1.bf16.msra.mxu0 %v264
  %331 = vmatprep.subr.bf16.mxu0 0
  %332 = vmatpush1.bf16.msra.mxu0 %v265
  %333 = vmatprep.subr.bf16.mxu0 0
  %334 = vmatpush1.bf16.msra.mxu0 %v266
  %335 = vmatprep.subr.bf16.mxu0 0
  %336 = vmatpush1.bf16.msra.mxu0 %v267
  %337 = vmatprep.mubr.bf16.mxu0 %v153
  %338 = vmatmul.mubr.bf16.gmra.mrb[0].mxu0 %v152
  %v339 = vpop.f32.mrb[0].mxu0
  %v340 = vadd.f32 %v85, %v339
  %v341 = vpop.f32.mrb[0].mxu0
  %v342 = vpop.f32.mrb[0].mxu0
  %v343 = vadd.f32 %v90, %v342
  %v344 = vpop.f32.mrb[0].mxu0
  %345 = vmatprep.mubr.bf16.mxu0 %v156
  %346 = vmatmul.mubr.bf16.gmra.mrb[0].mxu0 %v155
  %v347 = vpop.f32.mrb[0].mxu0
  %v348 = vadd.f32 %v95, %v347
  %v349 = vpop.f32.mrb[0].mxu0
  %v350 = vpop.f32.mrb[0].mxu0
  %v351 = vadd.f32 %v100, %v350
  %v352 = vpop.f32.mrb[0].mxu0
  %353 = vmatprep.mubr.bf16.mxu0 %v159
  %354 = vmatmul.mubr.bf16.gmra.mrb[0].mxu0 %v158
  %v355 = vpop.f32.mrb[0].mxu0
  %v356 = vadd.f32 %v105, %v355
  %v357 = vpop.f32.mrb[0].mxu0
  %v358 = vpop.f32.mrb[0].mxu0
  %v359 = vadd.f32 %v110, %v358
  %v360 = vpop.f32.mrb[0].mxu0
  %361 = vmatprep.mubr.bf16.mxu0 %v162
  %362 = vmatmul.mubr.bf16.gmra.mrb[0].mxu0 %v161
  %v363 = vpop.f32.mrb[0].mxu0
  %v364 = vadd.f32 %v115, %v363
  %v365 = vpop.f32.mrb[0].mxu0
  %v366 = vpop.f32.mrb[0].mxu0
  %v367 = vpop.f32.mrb[0].mxu0
  %368 = vdwg.mxu0
  %369 = vmatprep.subr.bf16.mxu0 0
  %370 = vmatpush1.bf16.msra.mxu0 %v268
  %371 = vmatprep.subr.bf16.mxu0 0
  %372 = vmatpush1.bf16.msra.mxu0 %v269
  %373 = vmatprep.subr.bf16.mxu0 0
  %374 = vmatpush1.bf16.msra.mxu0 %v270
  %375 = vmatprep.subr.bf16.mxu0 0
  %376 = vmatpush1.bf16.msra.mxu0 %v271
  %377 = vmatprep.subr.bf16.mxu0 0
  %378 = vmatpush1.bf16.msra.mxu0 0
  %379 = vmatprep.subr.bf16.mxu0 0
  %380 = vmatpush1.bf16.msra.mxu0 0
  %381 = vmatprep.subr.bf16.mxu0 0
  %382 = vmatpush1.bf16.msra.mxu0 0
  %383 = vmatprep.subr.bf16.mxu0 0
  %384 = vmatpush1.bf16.msra.mxu0 0
  %385 = vmatprep.subr.bf16.mxu0 0
  %386 = vmatpush1.bf16.msra.mxu0 0
  %387 = vmatprep.subr.bf16.mxu0 0
  %388 = vmatpush1.bf16.msra.mxu0 0
  %389 = vmatprep.subr.bf16.mxu0 0
  %390 = vmatpush1.bf16.msra.mxu0 0
  %391 = vmatprep.subr.bf16.mxu0 0
  %392 = vmatpush1.bf16.msra.mxu0 0
  %393 = vmatprep.subr.bf16.mxu0 0
  %394 = vmatpush1.bf16.msra.mxu0 0
  %395 = vmatprep.subr.bf16.mxu0 0
  %396 = vmatpush1.bf16.msra.mxu0 0
  %397 = vmatprep.subr.bf16.mxu0 0
  %398 = vmatpush1.bf16.msra.mxu0 0
  %399 = vmatprep.subr.bf16.mxu0 0
  %400 = vmatpush1.bf16.msra.mxu0 0
  %401 = vmatprep.mubr.bf16.mxu0 0
  %402 = vmatmul.mubr.bf16.gmra.mrb[0].mxu0 %v294
  %v403 = vpop.f32.mrb[0].mxu0
  %v404 = vadd.f32 %v340, %v403
  %v405 = vpop.f32.mrb[0].mxu0
  %v406 = vpop.f32.mrb[0].mxu0
  %v407 = vadd.f32 %v343, %v406
  %v408 = vpop.f32.mrb[0].mxu0
  %409 = vmatprep.mubr.bf16.mxu0 0
  %410 = vmatmul.mubr.bf16.gmra.mrb[0].mxu0 %v297
  %v411 = vpop.f32.mrb[0].mxu0
  %v412 = vadd.f32 %v348, %v411
  %v413 = vpop.f32.mrb[0].mxu0
  %v414 = vpop.f32.mrb[0].mxu0
  %v415 = vadd.f32 %v351, %v414
  %v416 = vpop.f32.mrb[0].mxu0
  %417 = vmatprep.mubr.bf16.mxu0 0
  %418 = vmatmul.mubr.bf16.gmra.mrb[0].mxu0 %v300
  %v419 = vpop.f32.mrb[0].mxu0
  %v420 = vadd.f32 %v356, %v419
  %v421 = vpop.f32.mrb[0].mxu0
  %v422 = vpop.f32.mrb[0].mxu0
  %v423 = vadd.f32 %v359, %v422
  %v424 = vpop.f32.mrb[0].mxu0
  %425 = vmatprep.mubr.bf16.mxu0 0
  %426 = vmatmul.mubr.bf16.gmra.mrb[0].mxu0 %v303
  %v427 = vpop.f32.mrb[0].mxu0
  %v428 = vadd.f32 %v364, %v427
  %v429 = vpop.f32.mrb[0].mxu0
  %v430 = vpop.f32.mrb[0].mxu0
  %v431 = vpop.f32.mrb[0].mxu0
  %432 = vdwg.mxu0
  %v433 = vmax.f32 %v404, 0.0
  %v434 = vmax.f32 %v407, 0.0
  %v435 = vmax.f32 %v412, 0.0
  %v436 = vmax.f32 %v415, 0.0
  %v437 = vmax.f32 %v420, 0.0
  %v438 = vmax.f32 %v423, 0.0
  %v439 = vmax.f32 %v428, 0.0
  %v440 = vpack.c.bf16 %v434, %v433
  %v441 = vpack.c.bf16 %v436, %v435
  %v442 = vpack.c.bf16 %v438, %v437
  %v443 = vpack.c.bf16 %v439, %v439
  %v448 = vunpack.c.l.b16 %v440
  %v449 = vunpack.c.h.b16 %v440
  %v450 = vunpack.c.l.b16 %v441
  %v451 = vunpack.c.h.b16 %v441
  %v452 = vunpack.c.l.b16 %v442
  %v453 = vunpack.c.h.b16 %v442
  %v454 = vunpack.c.l.b16 %v443
  %v455 = vpack.c.b16 %v448, %v448
  %v456 = vpack.c.b16 %v449, %v449
  %v457 = vpack.c.b16 %v450, %v450
  %v458 = vpack.c.b16 %v451, %v451
  %v459 = vpack.c.b16 %v452, %v452
  %v460 = vpack.c.b16 %v453, %v453
  %v461 = vpack.c.b16 %v454, %v454
  %469 = vst [vmem:[#allocation2] sm:$0xf] %v455
  %470 = vst [vmem:[#allocation2 + $0x4] sm:$0xf] %v456
  %471 = vst [vmem:[#allocation2 + $0x8] sm:$0xf] %v457
  %472 = vst [vmem:[#allocation2 + $0xc] sm:$0xf] %v458
  %473 = vst [vmem:[#allocation2 + $0x10] sm:$0xf] %v459
  %474 = vst [vmem:[#allocation2 + $0x14] sm:$0xf] %v460
  %475 = vst [vmem:[#allocation2 + $0x18] sm:$0x1] %v461
  %v476 = vld [vmem:[%s3] sm:$0xf]
  %v477 = vld [vmem:[%s3 + $0x4] sm:$0x1]
  %v478 = vld [vmem:[#allocation2] sm:$0xf]
  %v479 = vld [vmem:[#allocation2 + $0x4] sm:$0xf]
  %v480 = vld [vmem:[#allocation2 + $0x8] sm:$0xf]
  %v481 = vld [vmem:[#allocation2 + $0xc] sm:$0xf]
  %v482 = vld [vmem:[#allocation2 + $0x10] sm:$0xf]
  %v483 = vld [vmem:[#allocation2 + $0x14] sm:$0xf]
  %v484 = vld [vmem:[#allocation2 + $0x18] sm:$0x1]
  %v485 = vld [vmem:[%s4] sm:$0xff]
  %v486 = vld [vmem:[%s4 + $0x8] sm:$0x3]
  %488 = vset.pattern.permute.xlu0 0
  %489 = vperm.xlu0 %488, %v485
  %v490 = vpop.permute.xlu0 %489
  %493 = vset.pattern.permute.xlu0 0
  %494 = vperm.xlu0 %493, %v486
  %v495 = vpop.permute.xlu0 %494
  %v499 = vunpack.c.l.b16 %v476
  %v500 = vunpack.c.l.b16 %v477
  %v501 = vpack.c.b16 %v500, %v499
  %v509 = vunpack.c.l.b16 %v478
  %v510 = vunpack.c.l.b16 %v479
  %v511 = vunpack.c.l.b16 %v480
  %v512 = vunpack.c.l.b16 %v481
  %v513 = vunpack.c.l.b16 %v482
  %v514 = vunpack.c.l.b16 %v483
  %v515 = vunpack.c.l.b16 %v484
  %v516 = vpack.c.b16 %v510, %v509
  %v517 = vpack.c.b16 %v512, %v511
  %v518 = vpack.c.b16 %v514, %v513
  %v519 = vpack.c.b16 %v515, %v515
  %vm523 = vcmask 408576
  %v525 = vsel %vm523, %v501, 0
  %vm527 = vcmask 1040384
  %v529 = vsel %vm527, %v519, 0
  %531 = vmatprep.subr.bf16.mxu0 0
  %532 = vmatpush1.bf16.msra.mxu0 %v516
  %533 = vmatprep.subr.bf16.mxu0 0
  %534 = vmatpush1.bf16.msra.mxu0 %v517
  %535 = vmatprep.subr.bf16.mxu0 0
  %536 = vmatpush1.bf16.msra.mxu0 %v518
  %537 = vmatprep.subr.bf16.mxu0 0
  %538 = vmatpush1.bf16.msra.mxu0 %v529
  %539 = vmatprep.subr.bf16.mxu0 0
  %540 = vmatpush1.bf16.msra.mxu0 0
  %541 = vmatprep.subr.bf16.mxu0 0
  %542 = vmatpush1.bf16.msra.mxu0 0
  %543 = vmatprep.subr.bf16.mxu0 0
  %544 = vmatpush1.bf16.msra.mxu0 0
  %545 = vmatprep.subr.bf16.mxu0 0
  %546 = vmatpush1.bf16.msra.mxu0 0
  %547 = vmatprep.subr.bf16.mxu0 0
  %548 = vmatpush1.bf16.msra.mxu0 0
  %549 = vmatprep.subr.bf16.mxu0 0
  %550 = vmatpush1.bf16.msra.mxu0 0
  %551 = vmatprep.subr.bf16.mxu0 0
  %552 = vmatpush1.bf16.msra.mxu0 0
  %553 = vmatprep.subr.bf16.mxu0 0
  %554 = vmatpush1.bf16.msra.mxu0 0
  %555 = vmatprep.subr.bf16.mxu0 0
  %556 = vmatpush1.bf16.msra.mxu0 0
  %557 = vmatprep.subr.bf16.mxu0 0
  %558 = vmatpush1.bf16.msra.mxu0 0
  %559 = vmatprep.subr.bf16.mxu0 0
  %560 = vmatpush1.bf16.msra.mxu0 0
  %561 = vmatprep.subr.bf16.mxu0 0
  %562 = vmatpush1.bf16.msra.mxu0 0
  %563 = vmatprep.mubr.bf16.mxu0 0
  %564 = vmatmul.mubr.bf16.gmra.mrb[0].mxu0 %v525
  %v565 = vpop.f32.mrb[0].mxu0
  %v566 = vadd.f32 %v490, %v565
  %v567 = vpop.f32.mrb[0].mxu0
  %v568 = vpop.f32.mrb[0].mxu0
  %v569 = vadd.f32 %v495, %v568
  %v570 = vpop.f32.mrb[0].mxu0
  %571 = vdwg.mxu0
  %572 = vst [vmem:[%s5] sm:$0xff] %v566
  %573 = vst [vmem:[%s5 + $0x8] sm:$0x3] %v569
  // Predicated region
  $region22: #{net_forward.5} parent=0 // pred_check
    _
  $region23: #{net_forward.5} parent=0 // pred_check_branch
    %575 = sbr.rel (0) target = $region25
  $region24: #{net_forward.5} parent=0 // pred_region
    _
  $region25: #{net_forward.5} parent=0 // pred_fallthru
    _
  // Predicated region
  $region26: #{net_forward.5} parent=0 // pred_check
    _
  $region27: #{net_forward.5} parent=0 // pred_check_branch
    %577 = sbr.rel (0) target = $region29
  $region28: #{net_forward.5} parent=0 // pred_region
    _
  $region29: #{net_forward.5} parent=0 // pred_fallthru
    _

</llo_original>
